<compile_context>
chip_gen: v5e
topology: v5e:2x2
jax: 0.10.0
libtpu: 0.0.40
codegen_flags: <defaults>
</compile_context>

<pallas_src>
import jax
import jax.numpy as jnp
import numpy as np
from jax.experimental import pallas as pl
from jax.experimental.pallas import tpu as pltpu


# ----------------------------------------------------------------------------
# Fused kernel: all LSTM layers + final Linear, everything resident in VMEM.
# ----------------------------------------------------------------------------
def _make_fused_kernel(T, N, H, num_layers):
    def kernel(*refs):
        # refs = [x_ref,
        #         (w_in, b, w_hh) * num_layers,
        #         w_lin, b_lin,
        #         out_ref,
        #         proj_sc, seq_sc]
        x_ref = refs[0]
        layer_refs = refs[1:1 + 3 * num_layers]
        wlin_ref = refs[1 + 3 * num_layers]
        blin_ref = refs[2 + 3 * num_layers]
        out_ref = refs[3 + 3 * num_layers]
        proj_sc = refs[4 + 3 * num_layers]   # (T*N, 4H) f32: x-projection + bias
        seq_sc = refs[5 + 3 * num_layers]    # (T*N, H)  f32: layer hidden sequence

        def run_layer(whh_ref):
            # Serial recurrence over time.  Only h @ W_hh^T sits on the
            # critical path; the x-projection (incl. bias) was precomputed
            # into proj_sc as one batched matmul.
            whh = whh_ref[...]                       # (H, 4H), hoisted load
            h = jnp.zeros((N, H), jnp.float32)
            c = jnp.zeros((N, H), jnp.float32)
            for t in range(T):                       # fully unrolled (static)
                row = t * N
                gates = proj_sc[pl.ds(row, N), :] + jnp.dot(
                    h, whh, preferred_element_type=jnp.float32)   # (N, 4H)
                sg = jax.nn.sigmoid(gates)           # full-vreg EUP op
                th = jnp.tanh(gates)                 # full-vreg EUP op
                # PyTorch gate order along lanes: i, f, g, o
                i_g = sg[:, 0 * H:1 * H]
                f_g = sg[:, 1 * H:2 * H]
                g_g = th[:, 2 * H:3 * H]
                o_g = sg[:, 3 * H:4 * H]
                c = f_g * c + i_g * g_g
                h = o_g * jnp.tanh(c)
                seq_sc[pl.ds(row, N), :] = h         # stays in VMEM

        # Layer 0 reads x; layers >= 1 read the previous layer's hidden seq.
        layer_in = x_ref[...].astype(jnp.float32)    # (T*N, D)
        for layer in range(num_layers):
            w_in_ref = layer_refs[3 * layer + 0]     # (K, 4H)  K = D or H
            b_ref = layer_refs[3 * layer + 1]        # (1, 4H)  b_ih + b_hh
            whh_ref = layer_refs[3 * layer + 2]      # (H, 4H)
            # Batched input projection for the whole sequence (one MXU pass).
            proj_sc[...] = jnp.dot(
                layer_in, w_in_ref[...],
                preferred_element_type=jnp.float32) + b_ref[...]
            run_layer(whh_ref)
            layer_in = seq_sc[...]                   # (T*N, H)

        # Final Linear over the whole sequence, fused into the same kernel.
        out_ref[...] = (jnp.dot(layer_in, wlin_ref[...],
                                preferred_element_type=jnp.float32)
                        + blin_ref[...]).astype(out_ref.dtype)

    return kernel


# ----------------------------------------------------------------------------
# Wrapper: single pallas_call for the full module forward.
# ----------------------------------------------------------------------------
def fused_forward(x, packed):
    """x: (T, N, input_size) float32 -> (T, N, out_features)."""
    T, N, D = x.shape
    num_layers = len(packed["w_hh"])
    H = packed["w_hh"][0].shape[0]
    G = 4 * H
    out_f = packed["b_lin"].shape[-1]

    x2d = x.reshape(T * N, D)

    inputs = [x2d]
    in_specs = [pl.BlockSpec((T * N, D), lambda: (0, 0))]
    for layer in range(num_layers):
        w_in = packed["w_in"][layer]
        b = packed["b"][layer]
        w_hh = packed["w_hh"][layer]
        inputs += [w_in, b, w_hh]
        in_specs += [
            pl.BlockSpec(w_in.shape, lambda: (0, 0)),
            pl.BlockSpec(b.shape, lambda: (0, 0)),
            pl.BlockSpec(w_hh.shape, lambda: (0, 0)),
        ]
    inputs += [packed["w_lin"], packed["b_lin"]]
    in_specs += [
        pl.BlockSpec(packed["w_lin"].shape, lambda: (0, 0)),
        pl.BlockSpec(packed["b_lin"].shape, lambda: (0, 0)),
    ]

    kernel = _make_fused_kernel(T, N, H, num_layers)

    out2d = pl.pallas_call(
        kernel,
        out_shape=jax.ShapeDtypeStruct((T * N, out_f), jnp.float32),
        grid=(),
        in_specs=in_specs,
        out_specs=pl.BlockSpec((T * N, out_f), lambda: (0, 0)),
        scratch_shapes=[
            pltpu.VMEM((T * N, G), jnp.float32),   # per-layer input projection
            pltpu.VMEM((T * N, H), jnp.float32),   # per-layer hidden sequence
        ],
    )(*inputs)
    return out2d.reshape(T, N, out_f)


# ----------------------------------------------------------------------------
# Parameters: PyTorch-layout init + one-time packing for the kernel.
# ----------------------------------------------------------------------------
def init_params(key, input_size, hidden_size, num_layers, out_features=50):
    """PyTorch-layout parameters, uniform(-1/sqrt(H), 1/sqrt(H)) like nn.LSTM."""
    params = {"lstm": []}
    k_lstm = 1.0 / float(np.sqrt(hidden_size))
    for layer in range(num_layers):
        in_dim = input_size if layer == 0 else hidden_size
        key, k1, k2, k3, k4 = jax.random.split(key, 5)
        params["lstm"].append({
            "w_ih": jax.random.uniform(k1, (4 * hidden_size, in_dim),
                                       jnp.float32, -k_lstm, k_lstm),
            "w_hh": jax.random.uniform(k2, (4 * hidden_size, hidden_size),
                                       jnp.float32, -k_lstm, k_lstm),
            "b_ih": jax.random.uniform(k3, (4 * hidden_size,),
                                       jnp.float32, -k_lstm, k_lstm),
            "b_hh": jax.random.uniform(k4, (4 * hidden_size,),
                                       jnp.float32, -k_lstm, k_lstm),
        })
    k_lin = 1.0 / float(np.sqrt(hidden_size))
    key, k1, k2 = jax.random.split(key, 3)
    params["linear"] = {
        "w": jax.random.uniform(k1, (out_features, hidden_size),
                                jnp.float32, -k_lin, k_lin),
        "b": jax.random.uniform(k2, (out_features,),
                                jnp.float32, -k_lin, k_lin),
    }
    return params


def pack_params(raw):
    """One-time repack into the kernel layout: transpose weights, sum biases.

    Done once (outside the forward) so no per-call transpose/add ops remain."""
    packed = {"w_in": [], "b": [], "w_hh": []}
    for lp in raw["lstm"]:
        packed["w_in"].append(jnp.transpose(lp["w_ih"]))                 # (K, 4H)
        packed["b"].append((lp["b_ih"] + lp["b_hh"]).reshape(1, -1))     # (1, 4H)
        packed["w_hh"].append(jnp.transpose(lp["w_hh"]))                 # (H, 4H)
    packed["w_lin"] = jnp.transpose(raw["linear"]["w"])                  # (H, out)
    packed["b_lin"] = raw["linear"]["b"].reshape(1, -1)                  # (1, out)
    return packed


# ----------------------------------------------------------------------------
# Pure-JAX reference (mirrors the PyTorch module) for a correctness check.
# ----------------------------------------------------------------------------
def reference_forward(x, raw):
    T, N, _ = x.shape
    h_seq = x.astype(jnp.float32)
    for lp in raw["lstm"]:
        H = lp["w_hh"].shape[-1]
        b = lp["b_ih"] + lp["b_hh"]
        h = jnp.zeros((N, H), jnp.float32)
        c = jnp.zeros((N, H), jnp.float32)
        outs = []
        for t in range(T):
            gates = h_seq[t] @ lp["w_ih"].T + h @ lp["w_hh"].T + b
            i = jax.nn.sigmoid(gates[:, 0 * H:1 * H])
            f = jax.nn.sigmoid(gates[:, 1 * H:2 * H])
            g = jnp.tanh(gates[:, 2 * H:3 * H])
            o = jax.nn.sigmoid(gates[:, 3 * H:4 * H])
            c = f * c + i * g
            h = o * jnp.tanh(c)
            outs.append(h)
        h_seq = jnp.stack(outs, axis=0)
    return h_seq @ raw["linear"]["w"].T + raw["linear"]["b"]


if __name__ == "__main__":
    # Small shapes consistent with the module's forward:
    # input (seq_len=8, batch=4, input_size=16), hidden=32, num_layers=2.
    INPUT_SIZE, HIDDEN, NUM_LAYERS = 16, 32, 2
    T, N = 8, 4

    key = jax.random.PRNGKey(0)
    key, xk = jax.random.split(key)
    x = jax.random.normal(xk, (T, N, INPUT_SIZE), dtype=jnp.float32)

    raw_params = init_params(key, INPUT_SIZE, HIDDEN, NUM_LAYERS)
    packed_params = pack_params(raw_params)   # one-time weight packing

    fwd = jax.jit(fused_forward)
    out = fwd(x, packed_params)
    jax.block_until_ready(out)

    assert out.shape == (T, N, 50), out.shape
    assert out.dtype == jnp.float32

    # Numerical check against a pure-JAX reference of the PyTorch module.
    ref = reference_forward(x, raw_params)
    np.testing.assert_allclose(np.asarray(out), np.asarray(ref),
                               rtol=1e-3, atol=1e-3)

    print("KERNEL_OK")
</pallas_src>

<mosaic_0001>
module attributes {stable_mosaic.version = 11 : i64} {
  func.func @kernel(%arg0: memref<32x16xf32, #tpu.memory_space<vmem>>, %arg1: memref<16x128xf32, #tpu.memory_space<vmem>>, %arg2: memref<1x128xf32, #tpu.memory_space<vmem>>, %arg3: memref<32x128xf32, #tpu.memory_space<vmem>>, %arg4: memref<32x128xf32, #tpu.memory_space<vmem>>, %arg5: memref<1x128xf32, #tpu.memory_space<vmem>>, %arg6: memref<32x128xf32, #tpu.memory_space<vmem>>, %arg7: memref<32x50xf32, #tpu.memory_space<vmem>>, %arg8: memref<1x50xf32, #tpu.memory_space<vmem>>, %arg9: memref<32x50xf32, #tpu.memory_space<vmem>>, %arg10: memref<32x128xf32, #tpu.memory_space<vmem>>, %arg11: memref<32x32xf32, #tpu.memory_space<vmem>>) attributes {dimension_semantics = [], scalar_prefetch = 0 : i64, scratch_operands = 2 : i64, tpu.core_type = #tpu.core_type<tc>} {
    %c0 = arith.constant 0 : index
    %c0_0 = arith.constant 0 : index
    %0 = vector.load %arg0[%c0, %c0_0] : memref<32x16xf32, #tpu.memory_space<vmem>>, vector<32x16xf32>
    %c0_1 = arith.constant 0 : index
    %c0_2 = arith.constant 0 : index
    %1 = vector.load %arg1[%c0_1, %c0_2] : memref<16x128xf32, #tpu.memory_space<vmem>>, vector<16x128xf32>
    %cst = arith.constant dense<0.000000e+00> : vector<32x128xf32>
    %2 = tpu.matmul %0, %1, %cst {dimension_numbers = #tpu.dot_dimension_numbers<[1], [0], [0], [1], [0, 0, 1, 1], [], []>} : vector<32x16xf32>, vector<16x128xf32>, vector<32x128xf32> -> vector<32x128xf32>
    %c0_3 = arith.constant 0 : index
    %c0_4 = arith.constant 0 : index
    %3 = vector.load %arg2[%c0_3, %c0_4] : memref<1x128xf32, #tpu.memory_space<vmem>>, vector<1x128xf32>
    %4 = vector.broadcast %3 : vector<1x128xf32> to vector<32x128xf32>
    %5 = arith.addf %2, %4 : vector<32x128xf32>
    %c0_5 = arith.constant 0 : index
    %c0_6 = arith.constant 0 : index
    %6 = vector.load %arg10[%c0_5, %c0_6] : memref<32x128xf32, #tpu.memory_space<vmem>>, vector<32x128xf32>
    tpu.vector_store %arg10[%c0_5, %c0_6], %5 {strides = array<i32>} : memref<32x128xf32, #tpu.memory_space<vmem>>, vector<32x128xf32>,
    %c0_7 = arith.constant 0 : index
    %c0_8 = arith.constant 0 : index
    %7 = vector.load %arg3[%c0_7, %c0_8] : memref<32x128xf32, #tpu.memory_space<vmem>>, vector<32x128xf32>
    %cst_9 = arith.constant 0.000000e+00 : f32
    %8 = vector.broadcast %cst_9 : f32 to vector<4x32xf32>
    %cst_10 = arith.constant 0.000000e+00 : f32
    %9 = vector.broadcast %cst_10 : f32 to vector<4x32xf32>
    %c0_11 = arith.constant 0 : index
    %c0_12 = arith.constant 0 : index
    %10 = vector.load %arg10[%c0_11, %c0_12] : memref<32x128xf32, #tpu.memory_space<vmem>>, vector<4x128xf32>
    %cst_13 = arith.constant dense<0.000000e+00> : vector<4x128xf32>
    %11 = tpu.matmul %8, %7, %cst_13 {dimension_numbers = #tpu.dot_dimension_numbers<[1], [0], [0], [1], [0, 0, 1, 1], [], []>} : vector<4x32xf32>, vector<32x128xf32>, vector<4x128xf32> -> vector<4x128xf32>
    %12 = arith.addf %10, %11 : vector<4x128xf32>
    %13 = arith.negf %12 : vector<4x128xf32>
    %14 = math.exp %13 : vector<4x128xf32>
    %cst_14 = arith.constant 1.000000e+00 : f32
    %15 = vector.broadcast %cst_14 : f32 to vector<4x128xf32>
    %16 = arith.addf %15, %14 : vector<4x128xf32>
    %17 = arith.divf %15, %16 : vector<4x128xf32>
    %18 = math.tanh %12 : vector<4x128xf32>
    %19 = vector.extract_strided_slice %17 {offsets = [0, 0], sizes = [4, 32], strides = [1, 1]} : vector<4x128xf32> to vector<4x32xf32>
    %20 = vector.extract_strided_slice %17 {offsets = [0, 32], sizes = [4, 32], strides = [1, 1]} : vector<4x128xf32> to vector<4x32xf32>
    %21 = vector.extract_strided_slice %18 {offsets = [0, 64], sizes = [4, 32], strides = [1, 1]} : vector<4x128xf32> to vector<4x32xf32>
    %22 = vector.extract_strided_slice %17 {offsets = [0, 96], sizes = [4, 32], strides = [1, 1]} : vector<4x128xf32> to vector<4x32xf32>
    %23 = arith.mulf %20, %9 : vector<4x32xf32>
    %24 = arith.mulf %19, %21 : vector<4x32xf32>
    %25 = arith.addf %23, %24 : vector<4x32xf32>
    %26 = math.tanh %25 : vector<4x32xf32>
    %27 = arith.mulf %22, %26 : vector<4x32xf32>
    %c0_15 = arith.constant 0 : index
    %c0_16 = arith.constant 0 : index
    %28 = vector.load %arg11[%c0_15, %c0_16] : memref<32x32xf32, #tpu.memory_space<vmem>>, vector<4x32xf32>
    tpu.vector_store %arg11[%c0_15, %c0_16], %27 {strides = array<i32>} : memref<32x32xf32, #tpu.memory_space<vmem>>, vector<4x32xf32>,
    %c4 = arith.constant 4 : index
    %c0_17 = arith.constant 0 : index
    %29 = vector.load %arg10[%c4, %c0_17] : memref<32x128xf32, #tpu.memory_space<vmem>>, vector<4x128xf32>
    %cst_18 = arith.constant dense<0.000000e+00> : vector<4x128xf32>
    %30 = tpu.matmul %27, %7, %cst_18 {dimension_numbers = #tpu.dot_dimension_numbers<[1], [0], [0], [1], [0, 0, 1, 1], [], []>} : vector<4x32xf32>, vector<32x128xf32>, vector<4x128xf32> -> vector<4x128xf32>
    %31 = arith.addf %29, %30 : vector<4x128xf32>
    %32 = arith.negf %31 : vector<4x128xf32>
    %33 = math.exp %32 : vector<4x128xf32>
    %cst_19 = arith.constant 1.000000e+00 : f32
    %34 = vector.broadcast %cst_19 : f32 to vector<4x128xf32>
    %35 = arith.addf %34, %33 : vector<4x128xf32>
    %36 = arith.divf %34, %35 : vector<4x128xf32>
    %37 = math.tanh %31 : vector<4x128xf32>
    %38 = vector.extract_strided_slice %36 {offsets = [0, 0], sizes = [4, 32], strides = [1, 1]} : vector<4x128xf32> to vector<4x32xf32>
    %39 = vector.extract_strided_slice %36 {offsets = [0, 32], sizes = [4, 32], strides = [1, 1]} : vector<4x128xf32> to vector<4x32xf32>
    %40 = vector.extract_strided_slice %37 {offsets = [0, 64], sizes = [4, 32], strides = [1, 1]} : vector<4x128xf32> to vector<4x32xf32>
    %41 = vector.extract_strided_slice %36 {offsets = [0, 96], sizes = [4, 32], strides = [1, 1]} : vector<4x128xf32> to vector<4x32xf32>
    %42 = arith.mulf %39, %25 : vector<4x32xf32>
    %43 = arith.mulf %38, %40 : vector<4x32xf32>
    %44 = arith.addf %42, %43 : vector<4x32xf32>
    %45 = math.tanh %44 : vector<4x32xf32>
    %46 = arith.mulf %41, %45 : vector<4x32xf32>
    %c4_20 = arith.constant 4 : index
    %c0_21 = arith.constant 0 : index
    %47 = vector.load %arg11[%c4_20, %c0_21] : memref<32x32xf32, #tpu.memory_space<vmem>>, vector<4x32xf32>
    tpu.vector_store %arg11[%c4_20, %c0_21], %46 {strides = array<i32>} : memref<32x32xf32, #tpu.memory_space<vmem>>, vector<4x32xf32>,
    %c8 = arith.constant 8 : index
    %c0_22 = arith.constant 0 : index
    %48 = vector.load %arg10[%c8, %c0_22] : memref<32x128xf32, #tpu.memory_space<vmem>>, vector<4x128xf32>
    %cst_23 = arith.constant dense<0.000000e+00> : vector<4x128xf32>
    %49 = tpu.matmul %46, %7, %cst_23 {dimension_numbers = #tpu.dot_dimension_numbers<[1], [0], [0], [1], [0, 0, 1, 1], [], []>} : vector<4x32xf32>, vector<32x128xf32>, vector<4x128xf32> -> vector<4x128xf32>
    %50 = arith.addf %48, %49 : vector<4x128xf32>
    %51 = arith.negf %50 : vector<4x128xf32>
    %52 = math.exp %51 : vector<4x128xf32>
    %cst_24 = arith.constant 1.000000e+00 : f32
    %53 = vector.broadcast %cst_24 : f32 to vector<4x128xf32>
    %54 = arith.addf %53, %52 : vector<4x128xf32>
    %55 = arith.divf %53, %54 : vector<4x128xf32>
    %56 = math.tanh %50 : vector<4x128xf32>
    %57 = vector.extract_strided_slice %55 {offsets = [0, 0], sizes = [4, 32], strides = [1, 1]} : vector<4x128xf32> to vector<4x32xf32>
    %58 = vector.extract_strided_slice %55 {offsets = [0, 32], sizes = [4, 32], strides = [1, 1]} : vector<4x128xf32> to vector<4x32xf32>
    %59 = vector.extract_strided_slice %56 {offsets = [0, 64], sizes = [4, 32], strides = [1, 1]} : vector<4x128xf32> to vector<4x32xf32>
    %60 = vector.extract_strided_slice %55 {offsets = [0, 96], sizes = [4, 32], strides = [1, 1]} : vector<4x128xf32> to vector<4x32xf32>
    %61 = arith.mulf %58, %44 : vector<4x32xf32>
    %62 = arith.mulf %57, %59 : vector<4x32xf32>
    %63 = arith.addf %61, %62 : vector<4x32xf32>
    %64 = math.tanh %63 : vector<4x32xf32>
    %65 = arith.mulf %60, %64 : vector<4x32xf32>
    %c8_25 = arith.constant 8 : index
    %c0_26 = arith.constant 0 : index
    %66 = vector.load %arg11[%c8_25, %c0_26] : memref<32x32xf32, #tpu.memory_space<vmem>>, vector<4x32xf32>
    tpu.vector_store %arg11[%c8_25, %c0_26], %65 {strides = array<i32>} : memref<32x32xf32, #tpu.memory_space<vmem>>, vector<4x32xf32>,
    %c12 = arith.constant 12 : index
    %c0_27 = arith.constant 0 : index
    %67 = vector.load %arg10[%c12, %c0_27] : memref<32x128xf32, #tpu.memory_space<vmem>>, vector<4x128xf32>
    %cst_28 = arith.constant dense<0.000000e+00> : vector<4x128xf32>
    %68 = tpu.matmul %65, %7, %cst_28 {dimension_numbers = #tpu.dot_dimension_numbers<[1], [0], [0], [1], [0, 0, 1, 1], [], []>} : vector<4x32xf32>, vector<32x128xf32>, vector<4x128xf32> -> vector<4x128xf32>
    %69 = arith.addf %67, %68 : vector<4x128xf32>
    %70 = arith.negf %69 : vector<4x128xf32>
    %71 = math.exp %70 : vector<4x128xf32>
    %cst_29 = arith.constant 1.000000e+00 : f32
    %72 = vector.broadcast %cst_29 : f32 to vector<4x128xf32>
    %73 = arith.addf %72, %71 : vector<4x128xf32>
    %74 = arith.divf %72, %73 : vector<4x128xf32>
    %75 = math.tanh %69 : vector<4x128xf32>
    %76 = vector.extract_strided_slice %74 {offsets = [0, 0], sizes = [4, 32], strides = [1, 1]} : vector<4x128xf32> to vector<4x32xf32>
    %77 = vector.extract_strided_slice %74 {offsets = [0, 32], sizes = [4, 32], strides = [1, 1]} : vector<4x128xf32> to vector<4x32xf32>
    %78 = vector.extract_strided_slice %75 {offsets = [0, 64], sizes = [4, 32], strides = [1, 1]} : vector<4x128xf32> to vector<4x32xf32>
    %79 = vector.extract_strided_slice %74 {offsets = [0, 96], sizes = [4, 32], strides = [1, 1]} : vector<4x128xf32> to vector<4x32xf32>
    %80 = arith.mulf %77, %63 : vector<4x32xf32>
    %81 = arith.mulf %76, %78 : vector<4x32xf32>
    %82 = arith.addf %80, %81 : vector<4x32xf32>
    %83 = math.tanh %82 : vector<4x32xf32>
    %84 = arith.mulf %79, %83 : vector<4x32xf32>
    %c12_30 = arith.constant 12 : index
    %c0_31 = arith.constant 0 : index
    %85 = vector.load %arg11[%c12_30, %c0_31] : memref<32x32xf32, #tpu.memory_space<vmem>>, vector<4x32xf32>
    tpu.vector_store %arg11[%c12_30, %c0_31], %84 {strides = array<i32>} : memref<32x32xf32, #tpu.memory_space<vmem>>, vector<4x32xf32>,
    %c16 = arith.constant 16 : index
    %c0_32 = arith.constant 0 : index
    %86 = vector.load %arg10[%c16, %c0_32] : memref<32x128xf32, #tpu.memory_space<vmem>>, vector<4x128xf32>
    %cst_33 = arith.constant dense<0.000000e+00> : vector<4x128xf32>
    %87 = tpu.matmul %84, %7, %cst_33 {dimension_numbers = #tpu.dot_dimension_numbers<[1], [0], [0], [1], [0, 0, 1, 1], [], []>} : vector<4x32xf32>, vector<32x128xf32>, vector<4x128xf32> -> vector<4x128xf32>
    %88 = arith.addf %86, %87 : vector<4x128xf32>
    %89 = arith.negf %88 : vector<4x128xf32>
    %90 = math.exp %89 : vector<4x128xf32>
    %cst_34 = arith.constant 1.000000e+00 : f32
    %91 = vector.broadcast %cst_34 : f32 to vector<4x128xf32>
    %92 = arith.addf %91, %90 : vector<4x128xf32>
    %93 = arith.divf %91, %92 : vector<4x128xf32>
    %94 = math.tanh %88 : vector<4x128xf32>
    %95 = vector.extract_strided_slice %93 {offsets = [0, 0], sizes = [4, 32], strides = [1, 1]} : vector<4x128xf32> to vector<4x32xf32>
    %96 = vector.extract_strided_slice %93 {offsets = [0, 32], sizes = [4, 32], strides = [1, 1]} : vector<4x128xf32> to vector<4x32xf32>
    %97 = vector.extract_strided_slice %94 {offsets = [0, 64], sizes = [4, 32], strides = [1, 1]} : vector<4x128xf32> to vector<4x32xf32>
    %98 = vector.extract_strided_slice %93 {offsets = [0, 96], sizes = [4, 32], strides = [1, 1]} : vector<4x128xf32> to vector<4x32xf32>
    %99 = arith.mulf %96, %82 : vector<4x32xf32>
    %100 = arith.mulf %95, %97 : vector<4x32xf32>
    %101 = arith.addf %99, %100 : vector<4x32xf32>
    %102 = math.tanh %101 : vector<4x32xf32>
    %103 = arith.mulf %98, %102 : vector<4x32xf32>
    %c16_35 = arith.constant 16 : index
    %c0_36 = arith.constant 0 : index
    %104 = vector.load %arg11[%c16_35, %c0_36] : memref<32x32xf32, #tpu.memory_space<vmem>>, vector<4x32xf32>
    tpu.vector_store %arg11[%c16_35, %c0_36], %103 {strides = array<i32>} : memref<32x32xf32, #tpu.memory_space<vmem>>, vector<4x32xf32>,
    %c20 = arith.constant 20 : index
    %c0_37 = arith.constant 0 : index
    %105 = vector.load %arg10[%c20, %c0_37] : memref<32x128xf32, #tpu.memory_space<vmem>>, vector<4x128xf32>
    %cst_38 = arith.constant dense<0.000000e+00> : vector<4x128xf32>
    %106 = tpu.matmul %103, %7, %cst_38 {dimension_numbers = #tpu.dot_dimension_numbers<[1], [0], [0], [1], [0, 0, 1, 1], [], []>} : vector<4x32xf32>, vector<32x128xf32>, vector<4x128xf32> -> vector<4x128xf32>
    %107 = arith.addf %105, %106 : vector<4x128xf32>
    %108 = arith.negf %107 : vector<4x128xf32>
    %109 = math.exp %108 : vector<4x128xf32>
    %cst_39 = arith.constant 1.000000e+00 : f32
    %110 = vector.broadcast %cst_39 : f32 to vector<4x128xf32>
    %111 = arith.addf %110, %109 : vector<4x128xf32>
    %112 = arith.divf %110, %111 : vector<4x128xf32>
    %113 = math.tanh %107 : vector<4x128xf32>
    %114 = vector.extract_strided_slice %112 {offsets = [0, 0], sizes = [4, 32], strides = [1, 1]} : vector<4x128xf32> to vector<4x32xf32>
    %115 = vector.extract_strided_slice %112 {offsets = [0, 32], sizes = [4, 32], strides = [1, 1]} : vector<4x128xf32> to vector<4x32xf32>
    %116 = vector.extract_strided_slice %113 {offsets = [0, 64], sizes = [4, 32], strides = [1, 1]} : vector<4x128xf32> to vector<4x32xf32>
    %117 = vector.extract_strided_slice %112 {offsets = [0, 96], sizes = [4, 32], strides = [1, 1]} : vector<4x128xf32> to vector<4x32xf32>
    %118 = arith.mulf %115, %101 : vector<4x32xf32>
    %119 = arith.mulf %114, %116 : vector<4x32xf32>
    %120 = arith.addf %118, %119 : vector<4x32xf32>
    %121 = math.tanh %120 : vector<4x32xf32>
    %122 = arith.mulf %117, %121 : vector<4x32xf32>
    %c20_40 = arith.constant 20 : index
    %c0_41 = arith.constant 0 : index
    %123 = vector.load %arg11[%c20_40, %c0_41] : memref<32x32xf32, #tpu.memory_space<vmem>>, vector<4x32xf32>
    tpu.vector_store %arg11[%c20_40, %c0_41], %122 {strides = array<i32>} : memref<32x32xf32, #tpu.memory_space<vmem>>, vector<4x32xf32>,
    %c24 = arith.constant 24 : index
    %c0_42 = arith.constant 0 : index
    %124 = vector.load %arg10[%c24, %c0_42] : memref<32x128xf32, #tpu.memory_space<vmem>>, vector<4x128xf32>
    %cst_43 = arith.constant dense<0.000000e+00> : vector<4x128xf32>
    %125 = tpu.matmul %122, %7, %cst_43 {dimension_numbers = #tpu.dot_dimension_numbers<[1], [0], [0], [1], [0, 0, 1, 1], [], []>} : vector<4x32xf32>, vector<32x128xf32>, vector<4x128xf32> -> vector<4x128xf32>
    %126 = arith.addf %124, %125 : vector<4x128xf32>
    %127 = arith.negf %126 : vector<4x128xf32>
    %128 = math.exp %127 : vector<4x128xf32>
    %cst_44 = arith.constant 1.000000e+00 : f32
    %129 = vector.broadcast %cst_44 : f32 to vector<4x128xf32>
    %130 = arith.addf %129, %128 : vector<4x128xf32>
    %131 = arith.divf %129, %130 : vector<4x128xf32>
    %132 = math.tanh %126 : vector<4x128xf32>
    %133 = vector.extract_strided_slice %131 {offsets = [0, 0], sizes = [4, 32], strides = [1, 1]} : vector<4x128xf32> to vector<4x32xf32>
    %134 = vector.extract_strided_slice %131 {offsets = [0, 32], sizes = [4, 32], strides = [1, 1]} : vector<4x128xf32> to vector<4x32xf32>
    %135 = vector.extract_strided_slice %132 {offsets = [0, 64], sizes = [4, 32], strides = [1, 1]} : vector<4x128xf32> to vector<4x32xf32>
    %136 = vector.extract_strided_slice %131 {offsets = [0, 96], sizes = [4, 32], strides = [1, 1]} : vector<4x128xf32> to vector<4x32xf32>
    %137 = arith.mulf %134, %120 : vector<4x32xf32>
    %138 = arith.mulf %133, %135 : vector<4x32xf32>
    %139 = arith.addf %137, %138 : vector<4x32xf32>
    %140 = math.tanh %139 : vector<4x32xf32>
    %141 = arith.mulf %136, %140 : vector<4x32xf32>
    %c24_45 = arith.constant 24 : index
    %c0_46 = arith.constant 0 : index
    %142 = vector.load %arg11[%c24_45, %c0_46] : memref<32x32xf32, #tpu.memory_space<vmem>>, vector<4x32xf32>
    tpu.vector_store %arg11[%c24_45, %c0_46], %141 {strides = array<i32>} : memref<32x32xf32, #tpu.memory_space<vmem>>, vector<4x32xf32>,
    %c28 = arith.constant 28 : index
    %c0_47 = arith.constant 0 : index
    %143 = vector.load %arg10[%c28, %c0_47] : memref<32x128xf32, #tpu.memory_space<vmem>>, vector<4x128xf32>
    %cst_48 = arith.constant dense<0.000000e+00> : vector<4x128xf32>
    %144 = tpu.matmul %141, %7, %cst_48 {dimension_numbers = #tpu.dot_dimension_numbers<[1], [0], [0], [1], [0, 0, 1, 1], [], []>} : vector<4x32xf32>, vector<32x128xf32>, vector<4x128xf32> -> vector<4x128xf32>
    %145 = arith.addf %143, %144 : vector<4x128xf32>
    %146 = arith.negf %145 : vector<4x128xf32>
    %147 = math.exp %146 : vector<4x128xf32>
    %cst_49 = arith.constant 1.000000e+00 : f32
    %148 = vector.broadcast %cst_49 : f32 to vector<4x128xf32>
    %149 = arith.addf %148, %147 : vector<4x128xf32>
    %150 = arith.divf %148, %149 : vector<4x128xf32>
    %151 = math.tanh %145 : vector<4x128xf32>
    %152 = vector.extract_strided_slice %150 {offsets = [0, 0], sizes = [4, 32], strides = [1, 1]} : vector<4x128xf32> to vector<4x32xf32>
    %153 = vector.extract_strided_slice %150 {offsets = [0, 32], sizes = [4, 32], strides = [1, 1]} : vector<4x128xf32> to vector<4x32xf32>
    %154 = vector.extract_strided_slice %151 {offsets = [0, 64], sizes = [4, 32], strides = [1, 1]} : vector<4x128xf32> to vector<4x32xf32>
    %155 = vector.extract_strided_slice %150 {offsets = [0, 96], sizes = [4, 32], strides = [1, 1]} : vector<4x128xf32> to vector<4x32xf32>
    %156 = arith.mulf %153, %139 : vector<4x32xf32>
    %157 = arith.mulf %152, %154 : vector<4x32xf32>
    %158 = arith.addf %156, %157 : vector<4x32xf32>
    %159 = math.tanh %158 : vector<4x32xf32>
    %160 = arith.mulf %155, %159 : vector<4x32xf32>
    %c28_50 = arith.constant 28 : index
    %c0_51 = arith.constant 0 : index
    %161 = vector.load %arg11[%c28_50, %c0_51] : memref<32x32xf32, #tpu.memory_space<vmem>>, vector<4x32xf32>
    tpu.vector_store %arg11[%c28_50, %c0_51], %160 {strides = array<i32>} : memref<32x32xf32, #tpu.memory_space<vmem>>, vector<4x32xf32>,
    %c0_52 = arith.constant 0 : index
    %c0_53 = arith.constant 0 : index
    %162 = vector.load %arg11[%c0_52, %c0_53] : memref<32x32xf32, #tpu.memory_space<vmem>>, vector<32x32xf32>
    %c0_54 = arith.constant 0 : index
    %c0_55 = arith.constant 0 : index
    %163 = vector.load %arg4[%c0_54, %c0_55] : memref<32x128xf32, #tpu.memory_space<vmem>>, vector<32x128xf32>
    %cst_56 = arith.constant dense<0.000000e+00> : vector<32x128xf32>
    %164 = tpu.matmul %162, %163, %cst_56 {dimension_numbers = #tpu.dot_dimension_numbers<[1], [0], [0], [1], [0, 0, 1, 1], [], []>} : vector<32x32xf32>, vector<32x128xf32>, vector<32x128xf32> -> vector<32x128xf32>
    %c0_57 = arith.constant 0 : index
    %c0_58 = arith.constant 0 : index
    %165 = vector.load %arg5[%c0_57, %c0_58] : memref<1x128xf32, #tpu.memory_space<vmem>>, vector<1x128xf32>
    %166 = vector.broadcast %165 : vector<1x128xf32> to vector<32x128xf32>
    %167 = arith.addf %164, %166 : vector<32x128xf32>
    %c0_59 = arith.constant 0 : index
    %c0_60 = arith.constant 0 : index
    %168 = vector.load %arg10[%c0_59, %c0_60] : memref<32x128xf32, #tpu.memory_space<vmem>>, vector<32x128xf32>
    tpu.vector_store %arg10[%c0_59, %c0_60], %167 {strides = array<i32>} : memref<32x128xf32, #tpu.memory_space<vmem>>, vector<32x128xf32>,
    %c0_61 = arith.constant 0 : index
    %c0_62 = arith.constant 0 : index
    %169 = vector.load %arg6[%c0_61, %c0_62] : memref<32x128xf32, #tpu.memory_space<vmem>>, vector<32x128xf32>
    %cst_63 = arith.constant 0.000000e+00 : f32
    %170 = vector.broadcast %cst_63 : f32 to vector<4x32xf32>
    %cst_64 = arith.constant 0.000000e+00 : f32
    %171 = vector.broadcast %cst_64 : f32 to vector<4x32xf32>
    %c0_65 = arith.constant 0 : index
    %c0_66 = arith.constant 0 : index
    %172 = vector.load %arg10[%c0_65, %c0_66] : memref<32x128xf32, #tpu.memory_space<vmem>>, vector<4x128xf32>
    %cst_67 = arith.constant dense<0.000000e+00> : vector<4x128xf32>
    %173 = tpu.matmul %170, %169, %cst_67 {dimension_numbers = #tpu.dot_dimension_numbers<[1], [0], [0], [1], [0, 0, 1, 1], [], []>} : vector<4x32xf32>, vector<32x128xf32>, vector<4x128xf32> -> vector<4x128xf32>
    %174 = arith.addf %172, %173 : vector<4x128xf32>
    %175 = arith.negf %174 : vector<4x128xf32>
    %176 = math.exp %175 : vector<4x128xf32>
    %cst_68 = arith.constant 1.000000e+00 : f32
    %177 = vector.broadcast %cst_68 : f32 to vector<4x128xf32>
    %178 = arith.addf %177, %176 : vector<4x128xf32>
    %179 = arith.divf %177, %178 : vector<4x128xf32>
    %180 = math.tanh %174 : vector<4x128xf32>
    %181 = vector.extract_strided_slice %179 {offsets = [0, 0], sizes = [4, 32], strides = [1, 1]} : vector<4x128xf32> to vector<4x32xf32>
    %182 = vector.extract_strided_slice %179 {offsets = [0, 32], sizes = [4, 32], strides = [1, 1]} : vector<4x128xf32> to vector<4x32xf32>
    %183 = vector.extract_strided_slice %180 {offsets = [0, 64], sizes = [4, 32], strides = [1, 1]} : vector<4x128xf32> to vector<4x32xf32>
    %184 = vector.extract_strided_slice %179 {offsets = [0, 96], sizes = [4, 32], strides = [1, 1]} : vector<4x128xf32> to vector<4x32xf32>
    %185 = arith.mulf %182, %171 : vector<4x32xf32>
    %186 = arith.mulf %181, %183 : vector<4x32xf32>
    %187 = arith.addf %185, %186 : vector<4x32xf32>
    %188 = math.tanh %187 : vector<4x32xf32>
    %189 = arith.mulf %184, %188 : vector<4x32xf32>
    %c0_69 = arith.constant 0 : index
    %c0_70 = arith.constant 0 : index
    %190 = vector.load %arg11[%c0_69, %c0_70] : memref<32x32xf32, #tpu.memory_space<vmem>>, vector<4x32xf32>
    tpu.vector_store %arg11[%c0_69, %c0_70], %189 {strides = array<i32>} : memref<32x32xf32, #tpu.memory_space<vmem>>, vector<4x32xf32>,
    %c4_71 = arith.constant 4 : index
    %c0_72 = arith.constant 0 : index
    %191 = vector.load %arg10[%c4_71, %c0_72] : memref<32x128xf32, #tpu.memory_space<vmem>>, vector<4x128xf32>
    %cst_73 = arith.constant dense<0.000000e+00> : vector<4x128xf32>
    %192 = tpu.matmul %189, %169, %cst_73 {dimension_numbers = #tpu.dot_dimension_numbers<[1], [0], [0], [1], [0, 0, 1, 1], [], []>} : vector<4x32xf32>, vector<32x128xf32>, vector<4x128xf32> -> vector<4x128xf32>
    %193 = arith.addf %191, %192 : vector<4x128xf32>
    %194 = arith.negf %193 : vector<4x128xf32>
    %195 = math.exp %194 : vector<4x128xf32>
    %cst_74 = arith.constant 1.000000e+00 : f32
    %196 = vector.broadcast %cst_74 : f32 to vector<4x128xf32>
    %197 = arith.addf %196, %195 : vector<4x128xf32>
    %198 = arith.divf %196, %197 : vector<4x128xf32>
    %199 = math.tanh %193 : vector<4x128xf32>
    %200 = vector.extract_strided_slice %198 {offsets = [0, 0], sizes = [4, 32], strides = [1, 1]} : vector<4x128xf32> to vector<4x32xf32>
    %201 = vector.extract_strided_slice %198 {offsets = [0, 32], sizes = [4, 32], strides = [1, 1]} : vector<4x128xf32> to vector<4x32xf32>
    %202 = vector.extract_strided_slice %199 {offsets = [0, 64], sizes = [4, 32], strides = [1, 1]} : vector<4x128xf32> to vector<4x32xf32>
    %203 = vector.extract_strided_slice %198 {offsets = [0, 96], sizes = [4, 32], strides = [1, 1]} : vector<4x128xf32> to vector<4x32xf32>
    %204 = arith.mulf %201, %187 : vector<4x32xf32>
    %205 = arith.mulf %200, %202 : vector<4x32xf32>
    %206 = arith.addf %204, %205 : vector<4x32xf32>
    %207 = math.tanh %206 : vector<4x32xf32>
    %208 = arith.mulf %203, %207 : vector<4x32xf32>
    %c4_75 = arith.constant 4 : index
    %c0_76 = arith.constant 0 : index
    %209 = vector.load %arg11[%c4_75, %c0_76] : memref<32x32xf32, #tpu.memory_space<vmem>>, vector<4x32xf32>
    tpu.vector_store %arg11[%c4_75, %c0_76], %208 {strides = array<i32>} : memref<32x32xf32, #tpu.memory_space<vmem>>, vector<4x32xf32>,
    %c8_77 = arith.constant 8 : index
    %c0_78 = arith.constant 0 : index
    %210 = vector.load %arg10[%c8_77, %c0_78] : memref<32x128xf32, #tpu.memory_space<vmem>>, vector<4x128xf32>
    %cst_79 = arith.constant dense<0.000000e+00> : vector<4x128xf32>
    %211 = tpu.matmul %208, %169, %cst_79 {dimension_numbers = #tpu.dot_dimension_numbers<[1], [0], [0], [1], [0, 0, 1, 1], [], []>} : vector<4x32xf32>, vector<32x128xf32>, vector<4x128xf32> -> vector<4x128xf32>
    %212 = arith.addf %210, %211 : vector<4x128xf32>
    %213 = arith.negf %212 : vector<4x128xf32>
    %214 = math.exp %213 : vector<4x128xf32>
    %cst_80 = arith.constant 1.000000e+00 : f32
    %215 = vector.broadcast %cst_80 : f32 to vector<4x128xf32>
    %216 = arith.addf %215, %214 : vector<4x128xf32>
    %217 = arith.divf %215, %216 : vector<4x128xf32>
    %218 = math.tanh %212 : vector<4x128xf32>
    %219 = vector.extract_strided_slice %217 {offsets = [0, 0], sizes = [4, 32], strides = [1, 1]} : vector<4x128xf32> to vector<4x32xf32>
    %220 = vector.extract_strided_slice %217 {offsets = [0, 32], sizes = [4, 32], strides = [1, 1]} : vector<4x128xf32> to vector<4x32xf32>
    %221 = vector.extract_strided_slice %218 {offsets = [0, 64], sizes = [4, 32], strides = [1, 1]} : vector<4x128xf32> to vector<4x32xf32>
    %222 = vector.extract_strided_slice %217 {offsets = [0, 96], sizes = [4, 32], strides = [1, 1]} : vector<4x128xf32> to vector<4x32xf32>
    %223 = arith.mulf %220, %206 : vector<4x32xf32>
    %224 = arith.mulf %219, %221 : vector<4x32xf32>
    %225 = arith.addf %223, %224 : vector<4x32xf32>
    %226 = math.tanh %225 : vector<4x32xf32>
    %227 = arith.mulf %222, %226 : vector<4x32xf32>
    %c8_81 = arith.constant 8 : index
    %c0_82 = arith.constant 0 : index
    %228 = vector.load %arg11[%c8_81, %c0_82] : memref<32x32xf32, #tpu.memory_space<vmem>>, vector<4x32xf32>
    tpu.vector_store %arg11[%c8_81, %c0_82], %227 {strides = array<i32>} : memref<32x32xf32, #tpu.memory_space<vmem>>, vector<4x32xf32>,
    %c12_83 = arith.constant 12 : index
    %c0_84 = arith.constant 0 : index
    %229 = vector.load %arg10[%c12_83, %c0_84] : memref<32x128xf32, #tpu.memory_space<vmem>>, vector<4x128xf32>
    %cst_85 = arith.constant dense<0.000000e+00> : vector<4x128xf32>
    %230 = tpu.matmul %227, %169, %cst_85 {dimension_numbers = #tpu.dot_dimension_numbers<[1], [0], [0], [1], [0, 0, 1, 1], [], []>} : vector<4x32xf32>, vector<32x128xf32>, vector<4x128xf32> -> vector<4x128xf32>
    %231 = arith.addf %229, %230 : vector<4x128xf32>
    %232 = arith.negf %231 : vector<4x128xf32>
    %233 = math.exp %232 : vector<4x128xf32>
    %cst_86 = arith.constant 1.000000e+00 : f32
    %234 = vector.broadcast %cst_86 : f32 to vector<4x128xf32>
    %235 = arith.addf %234, %233 : vector<4x128xf32>
    %236 = arith.divf %234, %235 : vector<4x128xf32>
    %237 = math.tanh %231 : vector<4x128xf32>
    %238 = vector.extract_strided_slice %236 {offsets = [0, 0], sizes = [4, 32], strides = [1, 1]} : vector<4x128xf32> to vector<4x32xf32>
    %239 = vector.extract_strided_slice %236 {offsets = [0, 32], sizes = [4, 32], strides = [1, 1]} : vector<4x128xf32> to vector<4x32xf32>
    %240 = vector.extract_strided_slice %237 {offsets = [0, 64], sizes = [4, 32], strides = [1, 1]} : vector<4x128xf32> to vector<4x32xf32>
    %241 = vector.extract_strided_slice %236 {offsets = [0, 96], sizes = [4, 32], strides = [1, 1]} : vector<4x128xf32> to vector<4x32xf32>
    %242 = arith.mulf %239, %225 : vector<4x32xf32>
    %243 = arith.mulf %238, %240 : vector<4x32xf32>
    %244 = arith.addf %242, %243 : vector<4x32xf32>
    %245 = math.tanh %244 : vector<4x32xf32>
    %246 = arith.mulf %241, %245 : vector<4x32xf32>
    %c12_87 = arith.constant 12 : index
    %c0_88 = arith.constant 0 : index
    %247 = vector.load %arg11[%c12_87, %c0_88] : memref<32x32xf32, #tpu.memory_space<vmem>>, vector<4x32xf32>
    tpu.vector_store %arg11[%c12_87, %c0_88], %246 {strides = array<i32>} : memref<32x32xf32, #tpu.memory_space<vmem>>, vector<4x32xf32>,
    %c16_89 = arith.constant 16 : index
    %c0_90 = arith.constant 0 : index
    %248 = vector.load %arg10[%c16_89, %c0_90] : memref<32x128xf32, #tpu.memory_space<vmem>>, vector<4x128xf32>
    %cst_91 = arith.constant dense<0.000000e+00> : vector<4x128xf32>
    %249 = tpu.matmul %246, %169, %cst_91 {dimension_numbers = #tpu.dot_dimension_numbers<[1], [0], [0], [1], [0, 0, 1, 1], [], []>} : vector<4x32xf32>, vector<32x128xf32>, vector<4x128xf32> -> vector<4x128xf32>
    %250 = arith.addf %248, %249 : vector<4x128xf32>
    %251 = arith.negf %250 : vector<4x128xf32>
    %252 = math.exp %251 : vector<4x128xf32>
    %cst_92 = arith.constant 1.000000e+00 : f32
    %253 = vector.broadcast %cst_92 : f32 to vector<4x128xf32>
    %254 = arith.addf %253, %252 : vector<4x128xf32>
    %255 = arith.divf %253, %254 : vector<4x128xf32>
    %256 = math.tanh %250 : vector<4x128xf32>
    %257 = vector.extract_strided_slice %255 {offsets = [0, 0], sizes = [4, 32], strides = [1, 1]} : vector<4x128xf32> to vector<4x32xf32>
    %258 = vector.extract_strided_slice %255 {offsets = [0, 32], sizes = [4, 32], strides = [1, 1]} : vector<4x128xf32> to vector<4x32xf32>
    %259 = vector.extract_strided_slice %256 {offsets = [0, 64], sizes = [4, 32], strides = [1, 1]} : vector<4x128xf32> to vector<4x32xf32>
    %260 = vector.extract_strided_slice %255 {offsets = [0, 96], sizes = [4, 32], strides = [1, 1]} : vector<4x128xf32> to vector<4x32xf32>
    %261 = arith.mulf %258, %244 : vector<4x32xf32>
    %262 = arith.mulf %257, %259 : vector<4x32xf32>
    %263 = arith.addf %261, %262 : vector<4x32xf32>
    %264 = math.tanh %263 : vector<4x32xf32>
    %265 = arith.mulf %260, %264 : vector<4x32xf32>
    %c16_93 = arith.constant 16 : index
    %c0_94 = arith.constant 0 : index
    %266 = vector.load %arg11[%c16_93, %c0_94] : memref<32x32xf32, #tpu.memory_space<vmem>>, vector<4x32xf32>
    tpu.vector_store %arg11[%c16_93, %c0_94], %265 {strides = array<i32>} : memref<32x32xf32, #tpu.memory_space<vmem>>, vector<4x32xf32>,
    %c20_95 = arith.constant 20 : index
    %c0_96 = arith.constant 0 : index
    %267 = vector.load %arg10[%c20_95, %c0_96] : memref<32x128xf32, #tpu.memory_space<vmem>>, vector<4x128xf32>
    %cst_97 = arith.constant dense<0.000000e+00> : vector<4x128xf32>
    %268 = tpu.matmul %265, %169, %cst_97 {dimension_numbers = #tpu.dot_dimension_numbers<[1], [0], [0], [1], [0, 0, 1, 1], [], []>} : vector<4x32xf32>, vector<32x128xf32>, vector<4x128xf32> -> vector<4x128xf32>
    %269 = arith.addf %267, %268 : vector<4x128xf32>
    %270 = arith.negf %269 : vector<4x128xf32>
    %271 = math.exp %270 : vector<4x128xf32>
    %cst_98 = arith.constant 1.000000e+00 : f32
    %272 = vector.broadcast %cst_98 : f32 to vector<4x128xf32>
    %273 = arith.addf %272, %271 : vector<4x128xf32>
    %274 = arith.divf %272, %273 : vector<4x128xf32>
    %275 = math.tanh %269 : vector<4x128xf32>
    %276 = vector.extract_strided_slice %274 {offsets = [0, 0], sizes = [4, 32], strides = [1, 1]} : vector<4x128xf32> to vector<4x32xf32>
    %277 = vector.extract_strided_slice %274 {offsets = [0, 32], sizes = [4, 32], strides = [1, 1]} : vector<4x128xf32> to vector<4x32xf32>
    %278 = vector.extract_strided_slice %275 {offsets = [0, 64], sizes = [4, 32], strides = [1, 1]} : vector<4x128xf32> to vector<4x32xf32>
    %279 = vector.extract_strided_slice %274 {offsets = [0, 96], sizes = [4, 32], strides = [1, 1]} : vector<4x128xf32> to vector<4x32xf32>
    %280 = arith.mulf %277, %263 : vector<4x32xf32>
    %281 = arith.mulf %276, %278 : vector<4x32xf32>
    %282 = arith.addf %280, %281 : vector<4x32xf32>
    %283 = math.tanh %282 : vector<4x32xf32>
    %284 = arith.mulf %279, %283 : vector<4x32xf32>
    %c20_99 = arith.constant 20 : index
    %c0_100 = arith.constant 0 : index
    %285 = vector.load %arg11[%c20_99, %c0_100] : memref<32x32xf32, #tpu.memory_space<vmem>>, vector<4x32xf32>
    tpu.vector_store %arg11[%c20_99, %c0_100], %284 {strides = array<i32>} : memref<32x32xf32, #tpu.memory_space<vmem>>, vector<4x32xf32>,
    %c24_101 = arith.constant 24 : index
    %c0_102 = arith.constant 0 : index
    %286 = vector.load %arg10[%c24_101, %c0_102] : memref<32x128xf32, #tpu.memory_space<vmem>>, vector<4x128xf32>
    %cst_103 = arith.constant dense<0.000000e+00> : vector<4x128xf32>
    %287 = tpu.matmul %284, %169, %cst_103 {dimension_numbers = #tpu.dot_dimension_numbers<[1], [0], [0], [1], [0, 0, 1, 1], [], []>} : vector<4x32xf32>, vector<32x128xf32>, vector<4x128xf32> -> vector<4x128xf32>
    %288 = arith.addf %286, %287 : vector<4x128xf32>
    %289 = arith.negf %288 : vector<4x128xf32>
    %290 = math.exp %289 : vector<4x128xf32>
    %cst_104 = arith.constant 1.000000e+00 : f32
    %291 = vector.broadcast %cst_104 : f32 to vector<4x128xf32>
    %292 = arith.addf %291, %290 : vector<4x128xf32>
    %293 = arith.divf %291, %292 : vector<4x128xf32>
    %294 = math.tanh %288 : vector<4x128xf32>
    %295 = vector.extract_strided_slice %293 {offsets = [0, 0], sizes = [4, 32], strides = [1, 1]} : vector<4x128xf32> to vector<4x32xf32>
    %296 = vector.extract_strided_slice %293 {offsets = [0, 32], sizes = [4, 32], strides = [1, 1]} : vector<4x128xf32> to vector<4x32xf32>
    %297 = vector.extract_strided_slice %294 {offsets = [0, 64], sizes = [4, 32], strides = [1, 1]} : vector<4x128xf32> to vector<4x32xf32>
    %298 = vector.extract_strided_slice %293 {offsets = [0, 96], sizes = [4, 32], strides = [1, 1]} : vector<4x128xf32> to vector<4x32xf32>
    %299 = arith.mulf %296, %282 : vector<4x32xf32>
    %300 = arith.mulf %295, %297 : vector<4x32xf32>
    %301 = arith.addf %299, %300 : vector<4x32xf32>
    %302 = math.tanh %301 : vector<4x32xf32>
    %303 = arith.mulf %298, %302 : vector<4x32xf32>
    %c24_105 = arith.constant 24 : index
    %c0_106 = arith.constant 0 : index
    %304 = vector.load %arg11[%c24_105, %c0_106] : memref<32x32xf32, #tpu.memory_space<vmem>>, vector<4x32xf32>
    tpu.vector_store %arg11[%c24_105, %c0_106], %303 {strides = array<i32>} : memref<32x32xf32, #tpu.memory_space<vmem>>, vector<4x32xf32>,
    %c28_107 = arith.constant 28 : index
    %c0_108 = arith.constant 0 : index
    %305 = vector.load %arg10[%c28_107, %c0_108] : memref<32x128xf32, #tpu.memory_space<vmem>>, vector<4x128xf32>
    %cst_109 = arith.constant dense<0.000000e+00> : vector<4x128xf32>
    %306 = tpu.matmul %303, %169, %cst_109 {dimension_numbers = #tpu.dot_dimension_numbers<[1], [0], [0], [1], [0, 0, 1, 1], [], []>} : vector<4x32xf32>, vector<32x128xf32>, vector<4x128xf32> -> vector<4x128xf32>
    %307 = arith.addf %305, %306 : vector<4x128xf32>
    %308 = arith.negf %307 : vector<4x128xf32>
    %309 = math.exp %308 : vector<4x128xf32>
    %cst_110 = arith.constant 1.000000e+00 : f32
    %310 = vector.broadcast %cst_110 : f32 to vector<4x128xf32>
    %311 = arith.addf %310, %309 : vector<4x128xf32>
    %312 = arith.divf %310, %311 : vector<4x128xf32>
    %313 = math.tanh %307 : vector<4x128xf32>
    %314 = vector.extract_strided_slice %312 {offsets = [0, 0], sizes = [4, 32], strides = [1, 1]} : vector<4x128xf32> to vector<4x32xf32>
    %315 = vector.extract_strided_slice %312 {offsets = [0, 32], sizes = [4, 32], strides = [1, 1]} : vector<4x128xf32> to vector<4x32xf32>
    %316 = vector.extract_strided_slice %313 {offsets = [0, 64], sizes = [4, 32], strides = [1, 1]} : vector<4x128xf32> to vector<4x32xf32>
    %317 = vector.extract_strided_slice %312 {offsets = [0, 96], sizes = [4, 32], strides = [1, 1]} : vector<4x128xf32> to vector<4x32xf32>
    %318 = arith.mulf %315, %301 : vector<4x32xf32>
    %319 = arith.mulf %314, %316 : vector<4x32xf32>
    %320 = arith.addf %318, %319 : vector<4x32xf32>
    %321 = math.tanh %320 : vector<4x32xf32>
    %322 = arith.mulf %317, %321 : vector<4x32xf32>
    %c28_111 = arith.constant 28 : index
    %c0_112 = arith.constant 0 : index
    %323 = vector.load %arg11[%c28_111, %c0_112] : memref<32x32xf32, #tpu.memory_space<vmem>>, vector<4x32xf32>
    tpu.vector_store %arg11[%c28_111, %c0_112], %322 {strides = array<i32>} : memref<32x32xf32, #tpu.memory_space<vmem>>, vector<4x32xf32>,
    %c0_113 = arith.constant 0 : index
    %c0_114 = arith.constant 0 : index
    %324 = vector.load %arg11[%c0_113, %c0_114] : memref<32x32xf32, #tpu.memory_space<vmem>>, vector<32x32xf32>
    %c0_115 = arith.constant 0 : index
    %c0_116 = arith.constant 0 : index
    %325 = vector.load %arg7[%c0_115, %c0_116] : memref<32x50xf32, #tpu.memory_space<vmem>>, vector<32x50xf32>
    %cst_117 = arith.constant dense<0.000000e+00> : vector<32x50xf32>
    %326 = tpu.matmul %324, %325, %cst_117 {dimension_numbers = #tpu.dot_dimension_numbers<[1], [0], [0], [1], [0, 0, 1, 1], [], []>} : vector<32x32xf32>, vector<32x50xf32>, vector<32x50xf32> -> vector<32x50xf32>
    %c0_118 = arith.constant 0 : index
    %c0_119 = arith.constant 0 : index
    %327 = vector.load %arg8[%c0_118, %c0_119] : memref<1x50xf32, #tpu.memory_space<vmem>>, vector<1x50xf32>
    %328 = vector.broadcast %327 : vector<1x50xf32> to vector<32x50xf32>
    %329 = arith.addf %326, %328 : vector<32x50xf32>
    %c0_120 = arith.constant 0 : index
    %c0_121 = arith.constant 0 : index
    %330 = vector.load %arg9[%c0_120, %c0_121] : memref<32x50xf32, #tpu.memory_space<vmem>>, vector<32x50xf32>
    tpu.vector_store %arg9[%c0_120, %c0_121], %329 {strides = array<i32>} : memref<32x50xf32, #tpu.memory_space<vmem>>, vector<32x50xf32>,
    return
  }
}

</mosaic_0001>

<llo_original>
// kernel: fused_forward.1
$region0: #{fused_forward.1}
  #allocation0 [shape = 'u32[]', space=smem, size = 0x4, offset = 0x4, fixed_abs, tag = 'smem constant byte address 0x4 - core index']
  #allocation1 [shape = 'u32[72,128]{1,0:T(1,128)}', space=vmem, size = 0x9000, scoped, tag = 'internal scratch']
  #allocation2 [shape = 'f32[32,128]{1,0:T(8,128)}', space=vmem, size = 0x4000, scoped, tag = 'scratch operand']
  #allocation3 [shape = 'f32[32,32]{1,0:T(8,128)}', space=vmem, size = 0x4000, scoped, tag = 'scratch operand']
  %s0 = inlined_call_operand.hbm [shape: f32[32,16], index: 0, kind: input, shape index: {}]
  %s1 = inlined_call_operand.hbm [shape: f32[16,128], index: 1, kind: input, shape index: {}]
  %s2 = inlined_call_operand.vmem [shape: f32[1,128], index: 2, kind: input, shape index: {}]
  %s3 = inlined_call_operand.hbm [shape: f32[32,128], index: 3, kind: input, shape index: {}]
  %s4 = inlined_call_operand.hbm [shape: f32[32,128], index: 4, kind: input, shape index: {}]
  %s5 = inlined_call_operand.vmem [shape: f32[1,128], index: 5, kind: input, shape index: {}]
  %s6 = inlined_call_operand.hbm [shape: f32[32,128], index: 6, kind: input, shape index: {}]
  %s7 = inlined_call_operand.hbm [shape: f32[32,50], index: 7, kind: input, shape index: {}]
  %s8 = inlined_call_operand.vmem [shape: f32[1,50], index: 8, kind: input, shape index: {}]
  %s9 = inlined_call_operand.hbm [shape: f32[32,50], index: 9, kind: output, shape index: {}]
  %s10 = sld [smem:[#allocation0]]
  $region70: #{fused_forward.1} parent=0
    _
  %s12 = ssub.s32 1, %s10
  %s13 = scalar_select 0, %s12, %s10
  $region1: #{fused_forward.1} parent=0
    #allocation4 [shape = 'u8[16384]{0}', space=vmem, size = 0x4000, scoped, tag = 'input window, operand 0, single buffered']
    #allocation5 [shape = 's32[1]{0}', space=sflag, size = 0x4, scoped, tag = 'scoped memory for fused_forward.1']
    #allocation6 [shape = 's32[1]{0}', space=sflag, size = 0x4, scoped, tag = 'scoped memory for fused_forward.1']
    #allocation7 [shape = 'u8[8192]{0}', space=vmem, size = 0x2000, scoped, tag = 'input window, operand 1, single buffered']
    #allocation8 [shape = 's32[1]{0}', space=sflag, size = 0x4, scoped, tag = 'scoped memory for fused_forward.1']
    #allocation9 [shape = 'u8[16384]{0}', space=vmem, size = 0x4000, scoped, tag = 'input window, operand 3, single buffered']
    #allocation10 [shape = 'u8[16384]{0}', space=vmem, size = 0x4000, scoped, tag = 'input window, operand 4, single buffered']
    #allocation11 [shape = 's32[1]{0}', space=sflag, size = 0x4, scoped, tag = 'scoped memory for fused_forward.1']
    #allocation12 [shape = 'u8[16384]{0}', space=vmem, size = 0x4000, scoped, tag = 'input window, operand 6, single buffered']
    #allocation13 [shape = 'u8[16384]{0}', space=vmem, size = 0x4000, scoped, tag = 'input window, operand 7, single buffered']
    #allocation14 [shape = 's32[1]{0}', space=sflag, size = 0x4, scoped, tag = 'scoped memory for fused_forward.1']
    #allocation15 [shape = 'u8[16384]{0}', space=vmem, size = 0x4000, scoped, tag = 'output window, operand 0, single buffered']
    %14 = vsyncpa [#allocation5], 0
    %15 = vsyncpa [#allocation8], 0
    %16 = vsyncpa [#allocation11], 0
    %17 = vsyncpa [#allocation14], 0
    %18 = vsyncpa [#allocation6], 0
    // Predicated region
    $region2: #{fused_forward.1} parent=1 // pred_check
      _
    $region3: #{fused_forward.1} parent=1 // pred_check_branch
      %20 = sbr.rel (0) target = $region5
    $region4: #{fused_forward.1} parent=1 // pred_region
      %22 = vsyncadd [#allocation5], 0
      %s23 = sshll.u32 %s0, 4
      %s24 = int_to_ptr.hbm [resolvable:$true] %s23
      %s25 = sshll.u32 [#allocation4], 4
      %s26 = int_to_ptr.vmem [resolvable:$true] %s25
      %31 = dma.hbm_to_vmem [thread:$0]  %s24, 512, %s26, [#allocation5], 128, 128, 8
    $region5: #{fused_forward.1} parent=1 // pred_fallthru
      _
    // Predicated region
    $region6: #{fused_forward.1} parent=1 // pred_check
      _
    $region7: #{fused_forward.1} parent=1 // pred_check_branch
      %33 = sbr.rel (0) target = $region9
    $region8: #{fused_forward.1} parent=1 // pred_region
      %35 = vsyncadd [#allocation8], 0
      %s36 = sshll.u32 %s1, 4
      %s37 = int_to_ptr.hbm [resolvable:$true] %s36
      %s38 = sshll.u32 [#allocation7], 4
      %s39 = int_to_ptr.vmem [resolvable:$true] %s38
      %44 = dma.hbm_to_vmem [thread:$0]  %s37, 256, %s39, [#allocation8], 128, 128, 8
    $region9: #{fused_forward.1} parent=1 // pred_fallthru
      _
    // Predicated region
    $region10: #{fused_forward.1} parent=1 // pred_check
      _
    $region11: #{fused_forward.1} parent=1 // pred_check_branch
      %46 = sbr.rel (0) target = $region13
    $region12: #{fused_forward.1} parent=1 // pred_region
      _
    $region13: #{fused_forward.1} parent=1 // pred_fallthru
      _
    // Predicated region
    $region14: #{fused_forward.1} parent=1 // pred_check
      _
    $region15: #{fused_forward.1} parent=1 // pred_check_branch
      %48 = sbr.rel (0) target = $region17
    $region16: #{fused_forward.1} parent=1 // pred_region
      %50 = vsyncadd [#allocation8], 0
      %s51 = sshll.u32 %s3, 4
      %s52 = int_to_ptr.hbm [resolvable:$true] %s51
      %s53 = sshll.u32 [#allocation9], 4
      %s54 = int_to_ptr.vmem [resolvable:$true] %s53
      %59 = dma.hbm_to_vmem [thread:$0]  %s52, 512, %s54, [#allocation8], 128, 128, 8
    $region17: #{fused_forward.1} parent=1 // pred_fallthru
      _
    // Predicated region
    $region18: #{fused_forward.1} parent=1 // pred_check
      _
    $region19: #{fused_forward.1} parent=1 // pred_check_branch
      %61 = sbr.rel (0) target = $region21
    $region20: #{fused_forward.1} parent=1 // pred_region
      %63 = vsyncadd [#allocation11], 0
      %s64 = sshll.u32 %s4, 4
      %s65 = int_to_ptr.hbm [resolvable:$true] %s64
      %s66 = sshll.u32 [#allocation10], 4
      %s67 = int_to_ptr.vmem [resolvable:$true] %s66
      %72 = dma.hbm_to_vmem [thread:$0]  %s65, 512, %s67, [#allocation11], 128, 128, 8
    $region21: #{fused_forward.1} parent=1 // pred_fallthru
      _
    // Predicated region
    $region22: #{fused_forward.1} parent=1 // pred_check
      _
    $region23: #{fused_forward.1} parent=1 // pred_check_branch
      %74 = sbr.rel (0) target = $region25
    $region24: #{fused_forward.1} parent=1 // pred_region
      _
    $region25: #{fused_forward.1} parent=1 // pred_fallthru
      _
    // Predicated region
    $region26: #{fused_forward.1} parent=1 // pred_check
      _
    $region27: #{fused_forward.1} parent=1 // pred_check_branch
      %76 = sbr.rel (0) target = $region29
    $region28: #{fused_forward.1} parent=1 // pred_region
      %78 = vsyncadd [#allocation11], 0
      %s79 = sshll.u32 %s6, 4
      %s80 = int_to_ptr.hbm [resolvable:$true] %s79
      %s81 = sshll.u32 [#allocation12], 4
      %s82 = int_to_ptr.vmem [resolvable:$true] %s81
      %87 = dma.hbm_to_vmem [thread:$0]  %s80, 512, %s82, [#allocation11], 128, 128, 8
    $region29: #{fused_forward.1} parent=1 // pred_fallthru
      _
    // Predicated region
    $region30: #{fused_forward.1} parent=1 // pred_check
      _
    $region31: #{fused_forward.1} parent=1 // pred_check_branch
      %89 = sbr.rel (0) target = $region33
    $region32: #{fused_forward.1} parent=1 // pred_region
      %91 = vsyncadd [#allocation14], 0
      %s92 = sshll.u32 %s7, 4
      %s93 = int_to_ptr.hbm [resolvable:$true] %s92
      %s94 = sshll.u32 [#allocation13], 4
      %s95 = int_to_ptr.vmem [resolvable:$true] %s94
      %100 = dma.hbm_to_vmem [thread:$0]  %s93, 512, %s95, [#allocation14], 128, 128, 8
    $region33: #{fused_forward.1} parent=1 // pred_fallthru
      _
    // Predicated region
    $region34: #{fused_forward.1} parent=1 // pred_check
      _
    $region35: #{fused_forward.1} parent=1 // pred_check_branch
      %102 = sbr.rel (0) target = $region37
    $region36: #{fused_forward.1} parent=1 // pred_region
      _
    $region37: #{fused_forward.1} parent=1 // pred_fallthru
      _
    // Predicated region
    $region38: #{fused_forward.1} parent=1 // pred_check
      _
    $region39: #{fused_forward.1} parent=1 // pred_check_branch
      %104 = sbr.rel (0) target = $region41
    $region40: #{fused_forward.1} parent=1 // pred_region
      %106 = dma.done [#allocation5], 512
    $region41: #{fused_forward.1} parent=1 // pred_fallthru
      _
    // Predicated region
    $region42: #{fused_forward.1} parent=1 // pred_check
      _
    $region43: #{fused_forward.1} parent=1 // pred_check_branch
      %108 = sbr.rel (0) target = $region45
    $region44: #{fused_forward.1} parent=1 // pred_region
      %110 = dma.done [#allocation8], 256
    $region45: #{fused_forward.1} parent=1 // pred_fallthru
      _
    // Predicated region
    $region46: #{fused_forward.1} parent=1 // pred_check
      _
    $region47: #{fused_forward.1} parent=1 // pred_check_branch
      %112 = sbr.rel (0) target = $region49
    $region48: #{fused_forward.1} parent=1 // pred_region
      %114 = dma.done [#allocation8], 512
    $region49: #{fused_forward.1} parent=1 // pred_fallthru
      _
    // Predicated region
    $region50: #{fused_forward.1} parent=1 // pred_check
      _
    $region51: #{fused_forward.1} parent=1 // pred_check_branch
      %116 = sbr.rel (0) target = $region53
    $region52: #{fused_forward.1} parent=1 // pred_region
      %118 = dma.done [#allocation11], 512
    $region53: #{fused_forward.1} parent=1 // pred_fallthru
      _
    // Predicated region
    $region54: #{fused_forward.1} parent=1 // pred_check
      _
    $region55: #{fused_forward.1} parent=1 // pred_check_branch
      %120 = sbr.rel (0) target = $region57
    $region56: #{fused_forward.1} parent=1 // pred_region
      %122 = dma.done [#allocation11], 512
    $region57: #{fused_forward.1} parent=1 // pred_fallthru
      _
    // Predicated region
    $region58: #{fused_forward.1} parent=1 // pred_check
      _
    $region59: #{fused_forward.1} parent=1 // pred_check_branch
      %124 = sbr.rel (0) target = $region61
    $region60: #{fused_forward.1} parent=1 // pred_region
      %126 = dma.done [#allocation14], 512
    $region61: #{fused_forward.1} parent=1 // pred_fallthru
      _
    %v127 = vld [vmem:[#allocation4] sm:$0xff]
    %v128 = vld [vmem:[#allocation4 + $0x8] sm:$0xff]
    %v129 = vld [vmem:[#allocation4 + $0x10] sm:$0xff]
    %v130 = vld [vmem:[#allocation4 + $0x18] sm:$0xff]
    %v131 = vld [vmem:[#allocation7] sm:$0xff]
    %v132 = vld [vmem:[#allocation7 + $0x8] sm:$0xff]
    %v133 = vld [vmem:[%s2] sm:$0x1]
    %v135 = vperm.slane %v133, 0
    %vm137 = vcmask 130048
    %v139 = vsel %vm137, %v127, 0
    %v142 = vsel %vm137, %v128, 0
    %v145 = vsel %vm137, %v129, 0
    %v148 = vsel %vm137, %v130, 0
    %150 = vmatpush.msra.mxu0 0.0
    %151 = vmatpush.msra.mxu0 0.0
    %152 = vmatpush.msra.mxu0 0.0
    %153 = vmatpush.msra.mxu0 0.0
    %154 = vmatpush.msra.mxu0 0.0
    %155 = vmatpush.msra.mxu0 0.0
    %156 = vmatpush.msra.mxu0 0.0
    %157 = vmatpush.msra.mxu0 0.0
    %158 = vmatpush.msra.mxu0 0.0
    %159 = vmatpush.msra.mxu0 0.0
    %160 = vmatpush.msra.mxu0 0.0
    %161 = vmatpush.msra.mxu0 0.0
    %162 = vmatpush.msra.mxu0 0.0
    %163 = vmatpush.msra.mxu0 0.0
    %164 = vmatpush.msra.mxu0 %v132
    %165 = vmatpush.msra.mxu0 %v131
    %166 = vmatmul.f32.gmra.mxu0 %v139
    %v167 = vpop.f32.mrf.mxu0
    %v168 = vadd.f32 %v135, %v167
    %169 = vmatmul.f32.gmra.mxu0 %v142
    %v170 = vpop.f32.mrf.mxu0
    %v171 = vadd.f32 %v135, %v170
    %172 = vmatmul.f32.gmra.mxu0 %v145
    %v173 = vpop.f32.mrf.mxu0
    %v174 = vadd.f32 %v135, %v173
    %175 = vmatmul.f32.gmra.mxu0 %v148
    %v176 = vpop.f32.mrf.mxu0
    %v177 = vadd.f32 %v135, %v176
    %178 = vdwg.mxu0
    %179 = vst [vmem:[#allocation2] sm:$0xff] %v168
    %180 = vst [vmem:[#allocation2 + $0x8] sm:$0xff] %v171
    %181 = vst [vmem:[#allocation2 + $0x10] sm:$0xff] %v174
    %182 = vst [vmem:[#allocation2 + $0x18] sm:$0xff] %v177
    %v183 = vld [vmem:[#allocation9] sm:$0xff]
    %v184 = vld [vmem:[#allocation9 + $0x8] sm:$0xff]
    %v185 = vld [vmem:[#allocation9 + $0x10] sm:$0xff]
    %v186 = vld [vmem:[#allocation9 + $0x18] sm:$0xff]
    %v187 = vld [vmem:[#allocation2] sm:$0xf]
    %vm188 = vcmask 261120
    %v190 = vsel %vm188, 0.0, 0
    %192 = vmatpush.msra.mxu0 0.0
    %193 = vmatpush.msra.mxu0 0.0
    %194 = vmatpush.msra.mxu0 0.0
    %195 = vmatpush.msra.mxu0 0.0
    %196 = vmatpush.msra.mxu0 0.0
    %197 = vmatpush.msra.mxu0 0.0
    %198 = vmatpush.msra.mxu0 0.0
    %199 = vmatpush.msra.mxu0 0.0
    %200 = vmatpush.msra.mxu0 0.0
    %201 = vmatpush.msra.mxu0 0.0
    %202 = vmatpush.msra.mxu0 0.0
    %203 = vmatpush.msra.mxu0 0.0
    %204 = vmatpush.msra.mxu0 %v186
    %205 = vmatpush.msra.mxu0 %v185
    %206 = vmatpush.msra.mxu0 %v184
    %207 = vmatpush.msra.mxu0 %v183
    %208 = vmatmul.f32.gmra.mxu0 %v190
    %v209 = vpop.f32.mrf.mxu0
    %v210 = vadd.f32 0.0, %v209
    %211 = vdwg.mxu0
    %v212 = vadd.f32 %v187, %v210
    %v213 = vxor.u32 %v212, 2147483648
    %v214 = vmul.f32 %v213, 1.442695
    %v215 = vpow.pop %v214
    %v216 = vadd.f32 %v215, 1.0
    %v217 = vrcp.pop %v216
    %v218 = vmul.f32 %v216, %v217
    %v219 = vsub.f32 1.0, %v218
    %v220 = vmul.f32 %v217, %v219
    %v221 = vadd.f32 %v217, %v220
    %vm222 = vweird.f32 %v216
    %vm223 = vweird.f32 %v217
    %vm224 = vmor %vm222, %vm223
    %v225 = vsel %vm224, %v217, %v221
    %v226 = vand.u32 2147483647, %v216
    %vm227 = vcmp.eq.f32.partialorder %v226, 8.507059e+37
    %v228 = vand.u32 %v216, 2147483648
    %v229 = vor.u32 1.1754944e-38, %v228
    %v230 = vsel %vm227, %v229, %v225
    %v231 = vmul.f32 1.0, %v230
    %v232 = vtanh.pop %v212
    %v233 = vmul.f32 %v231, 0.0
    %235 = vrot.lane.b32.xlu0 %v232, 64
    %v236 = vpop.permute.xlu0 %235
    %v238 = vmul.f32 %v231, %v236
    %240 = vrot.lane.b32.xlu0 %v238, 32
    %v241 = vpop.permute.xlu0 %240
    %v243 = vadd.f32 %v233, %v241
    %v244 = vtanh.pop %v243
    %246 = vrot.lane.b32.xlu0 %v244, 64
    %v247 = vpop.permute.xlu0 %246
    %v249 = vmul.f32 %v231, %v247
    %251 = vrot.lane.b32.xlu0 %v249, 32
    %v252 = vpop.permute.xlu0 %251
    %vm254 = vcmask 257024
    %255 = vst.msk [vmem:[#allocation3] sm:$0xf] %vm254, %v252
    %v256 = vld [vmem:[#allocation2 + $0x4] sm:$0xf]
    %v257 = vsel %vm188, %v252, 0
    %259 = vmatpush.msra.mxu0 0.0
    %260 = vmatpush.msra.mxu0 0.0
    %261 = vmatpush.msra.mxu0 0.0
    %262 = vmatpush.msra.mxu0 0.0
    %263 = vmatpush.msra.mxu0 0.0
    %264 = vmatpush.msra.mxu0 0.0
    %265 = vmatpush.msra.mxu0 0.0
    %266 = vmatpush.msra.mxu0 0.0
    %267 = vmatpush.msra.mxu0 0.0
    %268 = vmatpush.msra.mxu0 0.0
    %269 = vmatpush.msra.mxu0 0.0
    %270 = vmatpush.msra.mxu0 0.0
    %271 = vmatpush.msra.mxu0 %v186
    %272 = vmatpush.msra.mxu0 %v185
    %273 = vmatpush.msra.mxu0 %v184
    %274 = vmatpush.msra.mxu0 %v183
    %275 = vmatmul.f32.gmra.mxu0 %v257
    %v276 = vpop.f32.mrf.mxu0
    %v277 = vadd.f32 0.0, %v276
    %278 = vdwg.mxu0
    %v279 = vadd.f32 %v256, %v277
    %v280 = vxor.u32 %v279, 2147483648
    %v281 = vmul.f32 %v280, 1.442695
    %v282 = vpow.pop %v281
    %v283 = vadd.f32 %v282, 1.0
    %v284 = vrcp.pop %v283
    %v285 = vmul.f32 %v283, %v284
    %v286 = vsub.f32 1.0, %v285
    %v287 = vmul.f32 %v284, %v286
    %v288 = vadd.f32 %v284, %v287
    %vm289 = vweird.f32 %v283
    %vm290 = vweird.f32 %v284
    %vm291 = vmor %vm289, %vm290
    %v292 = vsel %vm291, %v284, %v288
    %v293 = vand.u32 2147483647, %v283
    %vm294 = vcmp.eq.f32.partialorder %v293, 8.507059e+37
    %v295 = vand.u32 %v283, 2147483648
    %v296 = vor.u32 1.1754944e-38, %v295
    %v297 = vsel %vm294, %v296, %v292
    %v298 = vmul.f32 1.0, %v297
    %v299 = vtanh.pop %v279
    %v300 = vmul.f32 %v298, %v243
    %302 = vrot.lane.b32.xlu0 %v299, 64
    %v303 = vpop.permute.xlu0 %302
    %v305 = vmul.f32 %v298, %v303
    %307 = vrot.lane.b32.xlu0 %v305, 32
    %v308 = vpop.permute.xlu0 %307
    %v310 = vadd.f32 %v300, %v308
    %v311 = vtanh.pop %v310
    %313 = vrot.lane.b32.xlu0 %v311, 64
    %v314 = vpop.permute.xlu0 %313
    %v316 = vmul.f32 %v298, %v314
    %318 = vrot.lane.b32.xlu0 %v316, 32
    %v319 = vpop.permute.xlu0 %318
    %321 = vst.msk [vmem:[#allocation3 + $0x4] sm:$0xf] %vm254, %v319
    %v322 = vld [vmem:[#allocation2 + $0x8] sm:$0xf]
    %v323 = vsel %vm188, %v319, 0
    %325 = vmatpush.msra.mxu0 0.0
    %326 = vmatpush.msra.mxu0 0.0
    %327 = vmatpush.msra.mxu0 0.0
    %328 = vmatpush.msra.mxu0 0.0
    %329 = vmatpush.msra.mxu0 0.0
    %330 = vmatpush.msra.mxu0 0.0
    %331 = vmatpush.msra.mxu0 0.0
    %332 = vmatpush.msra.mxu0 0.0
    %333 = vmatpush.msra.mxu0 0.0
    %334 = vmatpush.msra.mxu0 0.0
    %335 = vmatpush.msra.mxu0 0.0
    %336 = vmatpush.msra.mxu0 0.0
    %337 = vmatpush.msra.mxu0 %v186
    %338 = vmatpush.msra.mxu0 %v185
    %339 = vmatpush.msra.mxu0 %v184
    %340 = vmatpush.msra.mxu0 %v183
    %341 = vmatmul.f32.gmra.mxu0 %v323
    %v342 = vpop.f32.mrf.mxu0
    %v343 = vadd.f32 0.0, %v342
    %344 = vdwg.mxu0
    %v345 = vadd.f32 %v322, %v343
    %v346 = vxor.u32 %v345, 2147483648
    %v347 = vmul.f32 %v346, 1.442695
    %v348 = vpow.pop %v347
    %v349 = vadd.f32 %v348, 1.0
    %v350 = vrcp.pop %v349
    %v351 = vmul.f32 %v349, %v350
    %v352 = vsub.f32 1.0, %v351
    %v353 = vmul.f32 %v350, %v352
    %v354 = vadd.f32 %v350, %v353
    %vm355 = vweird.f32 %v349
    %vm356 = vweird.f32 %v350
    %vm357 = vmor %vm355, %vm356
    %v358 = vsel %vm357, %v350, %v354
    %v359 = vand.u32 2147483647, %v349
    %vm360 = vcmp.eq.f32.partialorder %v359, 8.507059e+37
    %v361 = vand.u32 %v349, 2147483648
    %v362 = vor.u32 1.1754944e-38, %v361
    %v363 = vsel %vm360, %v362, %v358
    %v364 = vmul.f32 1.0, %v363
    %v365 = vtanh.pop %v345
    %v366 = vmul.f32 %v364, %v310
    %368 = vrot.lane.b32.xlu0 %v365, 64
    %v369 = vpop.permute.xlu0 %368
    %v371 = vmul.f32 %v364, %v369
    %373 = vrot.lane.b32.xlu0 %v371, 32
    %v374 = vpop.permute.xlu0 %373
    %v376 = vadd.f32 %v366, %v374
    %v377 = vtanh.pop %v376
    %379 = vrot.lane.b32.xlu0 %v377, 64
    %v380 = vpop.permute.xlu0 %379
    %v382 = vmul.f32 %v364, %v380
    %384 = vrot.lane.b32.xlu0 %v382, 32
    %v385 = vpop.permute.xlu0 %384
    %387 = vst.msk [vmem:[#allocation3 + $0x8] sm:$0xf] %vm254, %v385
    %v388 = vld [vmem:[#allocation2 + $0xc] sm:$0xf]
    %v389 = vsel %vm188, %v385, 0
    %391 = vmatpush.msra.mxu0 0.0
    %392 = vmatpush.msra.mxu0 0.0
    %393 = vmatpush.msra.mxu0 0.0
    %394 = vmatpush.msra.mxu0 0.0
    %395 = vmatpush.msra.mxu0 0.0
    %396 = vmatpush.msra.mxu0 0.0
    %397 = vmatpush.msra.mxu0 0.0
    %398 = vmatpush.msra.mxu0 0.0
    %399 = vmatpush.msra.mxu0 0.0
    %400 = vmatpush.msra.mxu0 0.0
    %401 = vmatpush.msra.mxu0 0.0
    %402 = vmatpush.msra.mxu0 0.0
    %403 = vmatpush.msra.mxu0 %v186
    %404 = vmatpush.msra.mxu0 %v185
    %405 = vmatpush.msra.mxu0 %v184
    %406 = vmatpush.msra.mxu0 %v183
    %407 = vmatmul.f32.gmra.mxu0 %v389
    %v408 = vpop.f32.mrf.mxu0
    %v409 = vadd.f32 0.0, %v408
    %410 = vdwg.mxu0
    %v411 = vadd.f32 %v388, %v409
    %v412 = vxor.u32 %v411, 2147483648
    %v413 = vmul.f32 %v412, 1.442695
    %v414 = vpow.pop %v413
    %v415 = vadd.f32 %v414, 1.0
    %v416 = vrcp.pop %v415
    %v417 = vmul.f32 %v415, %v416
    %v418 = vsub.f32 1.0, %v417
    %v419 = vmul.f32 %v416, %v418
    %v420 = vadd.f32 %v416, %v419
    %vm421 = vweird.f32 %v415
    %vm422 = vweird.f32 %v416
    %vm423 = vmor %vm421, %vm422
    %v424 = vsel %vm423, %v416, %v420
    %v425 = vand.u32 2147483647, %v415
    %vm426 = vcmp.eq.f32.partialorder %v425, 8.507059e+37
    %v427 = vand.u32 %v415, 2147483648
    %v428 = vor.u32 1.1754944e-38, %v427
    %v429 = vsel %vm426, %v428, %v424
    %v430 = vmul.f32 1.0, %v429
    %v431 = vtanh.pop %v411
    %v432 = vmul.f32 %v430, %v376
    %434 = vrot.lane.b32.xlu0 %v431, 64
    %v435 = vpop.permute.xlu0 %434
    %v437 = vmul.f32 %v430, %v435
    %439 = vrot.lane.b32.xlu0 %v437, 32
    %v440 = vpop.permute.xlu0 %439
    %v442 = vadd.f32 %v432, %v440
    %v443 = vtanh.pop %v442
    %445 = vrot.lane.b32.xlu0 %v443, 64
    %v446 = vpop.permute.xlu0 %445
    %v448 = vmul.f32 %v430, %v446
    %450 = vrot.lane.b32.xlu0 %v448, 32
    %v451 = vpop.permute.xlu0 %450
    %453 = vst.msk [vmem:[#allocation3 + $0xc] sm:$0xf] %vm254, %v451
    %v454 = vld [vmem:[#allocation2 + $0x10] sm:$0xf]
    %v455 = vsel %vm188, %v451, 0
    %457 = vmatpush.msra.mxu0 0.0
    %458 = vmatpush.msra.mxu0 0.0
    %459 = vmatpush.msra.mxu0 0.0
    %460 = vmatpush.msra.mxu0 0.0
    %461 = vmatpush.msra.mxu0 0.0
    %462 = vmatpush.msra.mxu0 0.0
    %463 = vmatpush.msra.mxu0 0.0
    %464 = vmatpush.msra.mxu0 0.0
    %465 = vmatpush.msra.mxu0 0.0
    %466 = vmatpush.msra.mxu0 0.0
    %467 = vmatpush.msra.mxu0 0.0
    %468 = vmatpush.msra.mxu0 0.0
    %469 = vmatpush.msra.mxu0 %v186
    %470 = vmatpush.msra.mxu0 %v185
    %471 = vmatpush.msra.mxu0 %v184
    %472 = vmatpush.msra.mxu0 %v183
    %473 = vmatmul.f32.gmra.mxu0 %v455
    %v474 = vpop.f32.mrf.mxu0
    %v475 = vadd.f32 0.0, %v474
    %476 = vdwg.mxu0
    %v477 = vadd.f32 %v454, %v475
    %v478 = vxor.u32 %v477, 2147483648
    %v479 = vmul.f32 %v478, 1.442695
    %v480 = vpow.pop %v479
    %v481 = vadd.f32 %v480, 1.0
    %v482 = vrcp.pop %v481
    %v483 = vmul.f32 %v481, %v482
    %v484 = vsub.f32 1.0, %v483
    %v485 = vmul.f32 %v482, %v484
    %v486 = vadd.f32 %v482, %v485
    %vm487 = vweird.f32 %v481
    %vm488 = vweird.f32 %v482
    %vm489 = vmor %vm487, %vm488
    %v490 = vsel %vm489, %v482, %v486
    %v491 = vand.u32 2147483647, %v481
    %vm492 = vcmp.eq.f32.partialorder %v491, 8.507059e+37
    %v493 = vand.u32 %v481, 2147483648
    %v494 = vor.u32 1.1754944e-38, %v493
    %v495 = vsel %vm492, %v494, %v490
    %v496 = vmul.f32 1.0, %v495
    %v497 = vtanh.pop %v477
    %v498 = vmul.f32 %v496, %v442
    %500 = vrot.lane.b32.xlu0 %v497, 64
    %v501 = vpop.permute.xlu0 %500
    %v503 = vmul.f32 %v496, %v501
    %505 = vrot.lane.b32.xlu0 %v503, 32
    %v506 = vpop.permute.xlu0 %505
    %v508 = vadd.f32 %v498, %v506
    %v509 = vtanh.pop %v508
    %511 = vrot.lane.b32.xlu0 %v509, 64
    %v512 = vpop.permute.xlu0 %511
    %v514 = vmul.f32 %v496, %v512
    %516 = vrot.lane.b32.xlu0 %v514, 32
    %v517 = vpop.permute.xlu0 %516
    %519 = vst.msk [vmem:[#allocation3 + $0x10] sm:$0xf] %vm254, %v517
    %v520 = vld [vmem:[#allocation2 + $0x14] sm:$0xf]
    %v521 = vsel %vm188, %v517, 0
    %523 = vmatpush.msra.mxu0 0.0
    %524 = vmatpush.msra.mxu0 0.0
    %525 = vmatpush.msra.mxu0 0.0
    %526 = vmatpush.msra.mxu0 0.0
    %527 = vmatpush.msra.mxu0 0.0
    %528 = vmatpush.msra.mxu0 0.0
    %529 = vmatpush.msra.mxu0 0.0
    %530 = vmatpush.msra.mxu0 0.0
    %531 = vmatpush.msra.mxu0 0.0
    %532 = vmatpush.msra.mxu0 0.0
    %533 = vmatpush.msra.mxu0 0.0
    %534 = vmatpush.msra.mxu0 0.0
    %535 = vmatpush.msra.mxu0 %v186
    %536 = vmatpush.msra.mxu0 %v185
    %537 = vmatpush.msra.mxu0 %v184
    %538 = vmatpush.msra.mxu0 %v183
    %539 = vmatmul.f32.gmra.mxu0 %v521
    %v540 = vpop.f32.mrf.mxu0
    %v541 = vadd.f32 0.0, %v540
    %542 = vdwg.mxu0
    %v543 = vadd.f32 %v520, %v541
    %v544 = vxor.u32 %v543, 2147483648
    %v545 = vmul.f32 %v544, 1.442695
    %v546 = vpow.pop %v545
    %v547 = vadd.f32 %v546, 1.0
    %v548 = vrcp.pop %v547
    %v549 = vmul.f32 %v547, %v548
    %v550 = vsub.f32 1.0, %v549
    %v551 = vmul.f32 %v548, %v550
    %v552 = vadd.f32 %v548, %v551
    %vm553 = vweird.f32 %v547
    %vm554 = vweird.f32 %v548
    %vm555 = vmor %vm553, %vm554
    %v556 = vsel %vm555, %v548, %v552
    %v557 = vand.u32 2147483647, %v547
    %vm558 = vcmp.eq.f32.partialorder %v557, 8.507059e+37
    %v559 = vand.u32 %v547, 2147483648
    %v560 = vor.u32 1.1754944e-38, %v559
    %v561 = vsel %vm558, %v560, %v556
    %v562 = vmul.f32 1.0, %v561
    %v563 = vtanh.pop %v543
    %v564 = vmul.f32 %v562, %v508
    %566 = vrot.lane.b32.xlu0 %v563, 64
    %v567 = vpop.permute.xlu0 %566
    %v569 = vmul.f32 %v562, %v567
    %571 = vrot.lane.b32.xlu0 %v569, 32
    %v572 = vpop.permute.xlu0 %571
    %v574 = vadd.f32 %v564, %v572
    %v575 = vtanh.pop %v574
    %577 = vrot.lane.b32.xlu0 %v575, 64
    %v578 = vpop.permute.xlu0 %577
    %v580 = vmul.f32 %v562, %v578
    %582 = vrot.lane.b32.xlu0 %v580, 32
    %v583 = vpop.permute.xlu0 %582
    %585 = vst.msk [vmem:[#allocation3 + $0x14] sm:$0xf] %vm254, %v583
    %v586 = vld [vmem:[#allocation2 + $0x18] sm:$0xf]
    %v587 = vsel %vm188, %v583, 0
    %589 = vmatpush.msra.mxu0 0.0
    %590 = vmatpush.msra.mxu0 0.0
    %591 = vmatpush.msra.mxu0 0.0
    %592 = vmatpush.msra.mxu0 0.0
    %593 = vmatpush.msra.mxu0 0.0
    %594 = vmatpush.msra.mxu0 0.0
    %595 = vmatpush.msra.mxu0 0.0
    %596 = vmatpush.msra.mxu0 0.0
    %597 = vmatpush.msra.mxu0 0.0
    %598 = vmatpush.msra.mxu0 0.0
    %599 = vmatpush.msra.mxu0 0.0
    %600 = vmatpush.msra.mxu0 0.0
    %601 = vmatpush.msra.mxu0 %v186
    %602 = vmatpush.msra.mxu0 %v185
    %603 = vmatpush.msra.mxu0 %v184
    %604 = vmatpush.msra.mxu0 %v183
    %605 = vmatmul.f32.gmra.mxu0 %v587
    %v606 = vpop.f32.mrf.mxu0
    %v607 = vadd.f32 0.0, %v606
    %608 = vdwg.mxu0
    %v609 = vadd.f32 %v586, %v607
    %v610 = vxor.u32 %v609, 2147483648
    %v611 = vmul.f32 %v610, 1.442695
    %v612 = vpow.pop %v611
    %v613 = vadd.f32 %v612, 1.0
    %v614 = vrcp.pop %v613
    %v615 = vmul.f32 %v613, %v614
    %v616 = vsub.f32 1.0, %v615
    %v617 = vmul.f32 %v614, %v616
    %v618 = vadd.f32 %v614, %v617
    %vm619 = vweird.f32 %v613
    %vm620 = vweird.f32 %v614
    %vm621 = vmor %vm619, %vm620
    %v622 = vsel %vm621, %v614, %v618
    %v623 = vand.u32 2147483647, %v613
    %vm624 = vcmp.eq.f32.partialorder %v623, 8.507059e+37
    %v625 = vand.u32 %v613, 2147483648
    %v626 = vor.u32 1.1754944e-38, %v625
    %v627 = vsel %vm624, %v626, %v622
    %v628 = vmul.f32 1.0, %v627
    %v629 = vtanh.pop %v609
    %v630 = vmul.f32 %v628, %v574
    %632 = vrot.lane.b32.xlu0 %v629, 64
    %v633 = vpop.permute.xlu0 %632
    %v635 = vmul.f32 %v628, %v633
    %637 = vrot.lane.b32.xlu0 %v635, 32
    %v638 = vpop.permute.xlu0 %637
    %v640 = vadd.f32 %v630, %v638
    %v641 = vtanh.pop %v640
    %643 = vrot.lane.b32.xlu0 %v641, 64
    %v644 = vpop.permute.xlu0 %643
    %v646 = vmul.f32 %v628, %v644
    %648 = vrot.lane.b32.xlu0 %v646, 32
    %v649 = vpop.permute.xlu0 %648
    %651 = vst.msk [vmem:[#allocation3 + $0x18] sm:$0xf] %vm254, %v649
    %v652 = vld [vmem:[#allocation2 + $0x1c] sm:$0xf]
    %v653 = vsel %vm188, %v649, 0
    %655 = vmatpush.msra.mxu0 0.0
    %656 = vmatpush.msra.mxu0 0.0
    %657 = vmatpush.msra.mxu0 0.0
    %658 = vmatpush.msra.mxu0 0.0
    %659 = vmatpush.msra.mxu0 0.0
    %660 = vmatpush.msra.mxu0 0.0
    %661 = vmatpush.msra.mxu0 0.0
    %662 = vmatpush.msra.mxu0 0.0
    %663 = vmatpush.msra.mxu0 0.0
    %664 = vmatpush.msra.mxu0 0.0
    %665 = vmatpush.msra.mxu0 0.0
    %666 = vmatpush.msra.mxu0 0.0
    %667 = vmatpush.msra.mxu0 %v186
    %668 = vmatpush.msra.mxu0 %v185
    %669 = vmatpush.msra.mxu0 %v184
    %670 = vmatpush.msra.mxu0 %v183
    %671 = vmatmul.f32.gmra.mxu0 %v653
    %v672 = vpop.f32.mrf.mxu0
    %v673 = vadd.f32 0.0, %v672
    %674 = vdwg.mxu0
    %v675 = vadd.f32 %v652, %v673
    %v676 = vxor.u32 %v675, 2147483648
    %v677 = vmul.f32 %v676, 1.442695
    %v678 = vpow.pop %v677
    %v679 = vadd.f32 %v678, 1.0
    %v680 = vrcp.pop %v679
    %v681 = vmul.f32 %v679, %v680
    %v682 = vsub.f32 1.0, %v681
    %v683 = vmul.f32 %v680, %v682
    %v684 = vadd.f32 %v680, %v683
    %vm685 = vweird.f32 %v679
    %vm686 = vweird.f32 %v680
    %vm687 = vmor %vm685, %vm686
    %v688 = vsel %vm687, %v680, %v684
    %v689 = vand.u32 2147483647, %v679
    %vm690 = vcmp.eq.f32.partialorder %v689, 8.507059e+37
    %v691 = vand.u32 %v679, 2147483648
    %v692 = vor.u32 1.1754944e-38, %v691
    %v693 = vsel %vm690, %v692, %v688
    %v694 = vmul.f32 1.0, %v693
    %v695 = vtanh.pop %v675
    %v696 = vmul.f32 %v694, %v640
    %698 = vrot.lane.b32.xlu0 %v695, 64
    %v699 = vpop.permute.xlu0 %698
    %v701 = vmul.f32 %v694, %v699
    %703 = vrot.lane.b32.xlu0 %v701, 32
    %v704 = vpop.permute.xlu0 %703
    %v706 = vadd.f32 %v696, %v704
    %v707 = vtanh.pop %v706
    %709 = vrot.lane.b32.xlu0 %v707, 64
    %v710 = vpop.permute.xlu0 %709
    %v712 = vmul.f32 %v694, %v710
    %714 = vrot.lane.b32.xlu0 %v712, 32
    %v715 = vpop.permute.xlu0 %714
    %717 = vst.msk [vmem:[#allocation3 + $0x1c] sm:$0xf] %vm254, %v715
    %v718 = vld [vmem:[#allocation3] sm:$0xff]
    %v719 = vld [vmem:[#allocation3 + $0x8] sm:$0xff]
    %v720 = vld [vmem:[#allocation3 + $0x10] sm:$0xff]
    %v721 = vld [vmem:[#allocation3 + $0x18] sm:$0xff]
    %v722 = vld [vmem:[#allocation10] sm:$0xff]
    %v723 = vld [vmem:[#allocation10 + $0x8] sm:$0xff]
    %v724 = vld [vmem:[#allocation10 + $0x10] sm:$0xff]
    %v725 = vld [vmem:[#allocation10 + $0x18] sm:$0xff]
    %v726 = vld [vmem:[%s5] sm:$0x1]
    %v728 = vperm.slane %v726, 0
    %v731 = vsel %vm188, %v718, 0
    %v734 = vsel %vm188, %v719, 0
    %v737 = vsel %vm188, %v720, 0
    %v740 = vsel %vm188, %v721, 0
    %742 = vmatpush.msra.mxu0 0.0
    %743 = vmatpush.msra.mxu0 0.0
    %744 = vmatpush.msra.mxu0 0.0
    %745 = vmatpush.msra.mxu0 0.0
    %746 = vmatpush.msra.mxu0 0.0
    %747 = vmatpush.msra.mxu0 0.0
    %748 = vmatpush.msra.mxu0 0.0
    %749 = vmatpush.msra.mxu0 0.0
    %750 = vmatpush.msra.mxu0 0.0
    %751 = vmatpush.msra.mxu0 0.0
    %752 = vmatpush.msra.mxu0 0.0
    %753 = vmatpush.msra.mxu0 0.0
    %754 = vmatpush.msra.mxu0 %v725
    %755 = vmatpush.msra.mxu0 %v724
    %756 = vmatpush.msra.mxu0 %v723
    %757 = vmatpush.msra.mxu0 %v722
    %758 = vmatmul.f32.gmra.mxu0 %v731
    %v759 = vpop.f32.mrf.mxu0
    %v760 = vadd.f32 %v728, %v759
    %761 = vmatmul.f32.gmra.mxu0 %v734
    %v762 = vpop.f32.mrf.mxu0
    %v763 = vadd.f32 %v728, %v762
    %764 = vmatmul.f32.gmra.mxu0 %v737
    %v765 = vpop.f32.mrf.mxu0
    %v766 = vadd.f32 %v728, %v765
    %767 = vmatmul.f32.gmra.mxu0 %v740
    %v768 = vpop.f32.mrf.mxu0
    %v769 = vadd.f32 %v728, %v768
    %770 = vdwg.mxu0
    %771 = vst [vmem:[#allocation2] sm:$0xff] %v760
    %772 = vst [vmem:[#allocation2 + $0x8] sm:$0xff] %v763
    %773 = vst [vmem:[#allocation2 + $0x10] sm:$0xff] %v766
    %774 = vst [vmem:[#allocation2 + $0x18] sm:$0xff] %v769
    %v775 = vld [vmem:[#allocation12] sm:$0xff]
    %v776 = vld [vmem:[#allocation12 + $0x8] sm:$0xff]
    %v777 = vld [vmem:[#allocation12 + $0x10] sm:$0xff]
    %v778 = vld [vmem:[#allocation12 + $0x18] sm:$0xff]
    %v779 = vld [vmem:[#allocation2] sm:$0xf]
    %780 = vmatpush.msra.mxu0 0.0
    %781 = vmatpush.msra.mxu0 0.0
    %782 = vmatpush.msra.mxu0 0.0
    %783 = vmatpush.msra.mxu0 0.0
    %784 = vmatpush.msra.mxu0 0.0
    %785 = vmatpush.msra.mxu0 0.0
    %786 = vmatpush.msra.mxu0 0.0
    %787 = vmatpush.msra.mxu0 0.0
    %788 = vmatpush.msra.mxu0 0.0
    %789 = vmatpush.msra.mxu0 0.0
    %790 = vmatpush.msra.mxu0 0.0
    %791 = vmatpush.msra.mxu0 0.0
    %792 = vmatpush.msra.mxu0 %v778
    %793 = vmatpush.msra.mxu0 %v777
    %794 = vmatpush.msra.mxu0 %v776
    %795 = vmatpush.msra.mxu0 %v775
    %796 = vmatmul.f32.gmra.mxu0 %v190
    %v797 = vpop.f32.mrf.mxu0
    %v798 = vadd.f32 0.0, %v797
    %799 = vdwg.mxu0
    %v800 = vadd.f32 %v779, %v798
    %v801 = vxor.u32 %v800, 2147483648
    %v802 = vmul.f32 %v801, 1.442695
    %v803 = vpow.pop %v802
    %v804 = vadd.f32 %v803, 1.0
    %v805 = vrcp.pop %v804
    %v806 = vmul.f32 %v804, %v805
    %v807 = vsub.f32 1.0, %v806
    %v808 = vmul.f32 %v805, %v807
    %v809 = vadd.f32 %v805, %v808
    %vm810 = vweird.f32 %v804
    %vm811 = vweird.f32 %v805
    %vm812 = vmor %vm810, %vm811
    %v813 = vsel %vm812, %v805, %v809
    %v814 = vand.u32 2147483647, %v804
    %vm815 = vcmp.eq.f32.partialorder %v814, 8.507059e+37
    %v816 = vand.u32 %v804, 2147483648
    %v817 = vor.u32 1.1754944e-38, %v816
    %v818 = vsel %vm815, %v817, %v813
    %v819 = vmul.f32 1.0, %v818
    %v820 = vtanh.pop %v800
    %v821 = vmul.f32 %v819, 0.0
    %823 = vrot.lane.b32.xlu0 %v820, 64
    %v824 = vpop.permute.xlu0 %823
    %v826 = vmul.f32 %v819, %v824
    %828 = vrot.lane.b32.xlu0 %v826, 32
    %v829 = vpop.permute.xlu0 %828
    %v831 = vadd.f32 %v821, %v829
    %v832 = vtanh.pop %v831
    %834 = vrot.lane.b32.xlu0 %v832, 64
    %v835 = vpop.permute.xlu0 %834
    %v837 = vmul.f32 %v819, %v835
    %839 = vrot.lane.b32.xlu0 %v837, 32
    %v840 = vpop.permute.xlu0 %839
    %842 = vst.msk [vmem:[#allocation3] sm:$0xf] %vm254, %v840
    %v843 = vld [vmem:[#allocation2 + $0x4] sm:$0xf]
    %v844 = vsel %vm188, %v840, 0
    %846 = vmatpush.msra.mxu0 0.0
    %847 = vmatpush.msra.mxu0 0.0
    %848 = vmatpush.msra.mxu0 0.0
    %849 = vmatpush.msra.mxu0 0.0
    %850 = vmatpush.msra.mxu0 0.0
    %851 = vmatpush.msra.mxu0 0.0
    %852 = vmatpush.msra.mxu0 0.0
    %853 = vmatpush.msra.mxu0 0.0
    %854 = vmatpush.msra.mxu0 0.0
    %855 = vmatpush.msra.mxu0 0.0
    %856 = vmatpush.msra.mxu0 0.0
    %857 = vmatpush.msra.mxu0 0.0
    %858 = vmatpush.msra.mxu0 %v778
    %859 = vmatpush.msra.mxu0 %v777
    %860 = vmatpush.msra.mxu0 %v776
    %861 = vmatpush.msra.mxu0 %v775
    %862 = vmatmul.f32.gmra.mxu0 %v844
    %v863 = vpop.f32.mrf.mxu0
    %v864 = vadd.f32 0.0, %v863
    %865 = vdwg.mxu0
    %v866 = vadd.f32 %v843, %v864
    %v867 = vxor.u32 %v866, 2147483648
    %v868 = vmul.f32 %v867, 1.442695
    %v869 = vpow.pop %v868
    %v870 = vadd.f32 %v869, 1.0
    %v871 = vrcp.pop %v870
    %v872 = vmul.f32 %v870, %v871
    %v873 = vsub.f32 1.0, %v872
    %v874 = vmul.f32 %v871, %v873
    %v875 = vadd.f32 %v871, %v874
    %vm876 = vweird.f32 %v870
    %vm877 = vweird.f32 %v871
    %vm878 = vmor %vm876, %vm877
    %v879 = vsel %vm878, %v871, %v875
    %v880 = vand.u32 2147483647, %v870
    %vm881 = vcmp.eq.f32.partialorder %v880, 8.507059e+37
    %v882 = vand.u32 %v870, 2147483648
    %v883 = vor.u32 1.1754944e-38, %v882
    %v884 = vsel %vm881, %v883, %v879
    %v885 = vmul.f32 1.0, %v884
    %v886 = vtanh.pop %v866
    %v887 = vmul.f32 %v885, %v831
    %889 = vrot.lane.b32.xlu0 %v886, 64
    %v890 = vpop.permute.xlu0 %889
    %v892 = vmul.f32 %v885, %v890
    %894 = vrot.lane.b32.xlu0 %v892, 32
    %v895 = vpop.permute.xlu0 %894
    %v897 = vadd.f32 %v887, %v895
    %v898 = vtanh.pop %v897
    %900 = vrot.lane.b32.xlu0 %v898, 64
    %v901 = vpop.permute.xlu0 %900
    %v903 = vmul.f32 %v885, %v901
    %905 = vrot.lane.b32.xlu0 %v903, 32
    %v906 = vpop.permute.xlu0 %905
    %908 = vst.msk [vmem:[#allocation3 + $0x4] sm:$0xf] %vm254, %v906
    %v909 = vld [vmem:[#allocation2 + $0x8] sm:$0xf]
    %v910 = vsel %vm188, %v906, 0
    %912 = vmatpush.msra.mxu0 0.0
    %913 = vmatpush.msra.mxu0 0.0
    %914 = vmatpush.msra.mxu0 0.0
    %915 = vmatpush.msra.mxu0 0.0
    %916 = vmatpush.msra.mxu0 0.0
    %917 = vmatpush.msra.mxu0 0.0
    %918 = vmatpush.msra.mxu0 0.0
    %919 = vmatpush.msra.mxu0 0.0
    %920 = vmatpush.msra.mxu0 0.0
    %921 = vmatpush.msra.mxu0 0.0
    %922 = vmatpush.msra.mxu0 0.0
    %923 = vmatpush.msra.mxu0 0.0
    %924 = vmatpush.msra.mxu0 %v778
    %925 = vmatpush.msra.mxu0 %v777
    %926 = vmatpush.msra.mxu0 %v776
    %927 = vmatpush.msra.mxu0 %v775
    %928 = vmatmul.f32.gmra.mxu0 %v910
    %v929 = vpop.f32.mrf.mxu0
    %v930 = vadd.f32 0.0, %v929
    %931 = vdwg.mxu0
    %v932 = vadd.f32 %v909, %v930
    %v933 = vxor.u32 %v932, 2147483648
    %v934 = vmul.f32 %v933, 1.442695
    %v935 = vpow.pop %v934
    %v936 = vadd.f32 %v935, 1.0
    %v937 = vrcp.pop %v936
    %v938 = vmul.f32 %v936, %v937
    %v939 = vsub.f32 1.0, %v938
    %v940 = vmul.f32 %v937, %v939
    %v941 = vadd.f32 %v937, %v940
    %vm942 = vweird.f32 %v936
    %vm943 = vweird.f32 %v937
    %vm944 = vmor %vm942, %vm943
    %v945 = vsel %vm944, %v937, %v941
    %v946 = vand.u32 2147483647, %v936
    %vm947 = vcmp.eq.f32.partialorder %v946, 8.507059e+37
    %v948 = vand.u32 %v936, 2147483648
    %v949 = vor.u32 1.1754944e-38, %v948
    %v950 = vsel %vm947, %v949, %v945
    %v951 = vmul.f32 1.0, %v950
    %v952 = vtanh.pop %v932
    %v953 = vmul.f32 %v951, %v897
    %955 = vrot.lane.b32.xlu0 %v952, 64
    %v956 = vpop.permute.xlu0 %955
    %v958 = vmul.f32 %v951, %v956
    %960 = vrot.lane.b32.xlu0 %v958, 32
    %v961 = vpop.permute.xlu0 %960
    %v963 = vadd.f32 %v953, %v961
    %v964 = vtanh.pop %v963
    %966 = vrot.lane.b32.xlu0 %v964, 64
    %v967 = vpop.permute.xlu0 %966
    %v969 = vmul.f32 %v951, %v967
    %971 = vrot.lane.b32.xlu0 %v969, 32
    %v972 = vpop.permute.xlu0 %971
    %974 = vst.msk [vmem:[#allocation3 + $0x8] sm:$0xf] %vm254, %v972
    %v975 = vld [vmem:[#allocation2 + $0xc] sm:$0xf]
    %v976 = vsel %vm188, %v972, 0
    %978 = vmatpush.msra.mxu0 0.0
    %979 = vmatpush.msra.mxu0 0.0
    %980 = vmatpush.msra.mxu0 0.0
    %981 = vmatpush.msra.mxu0 0.0
    %982 = vmatpush.msra.mxu0 0.0
    %983 = vmatpush.msra.mxu0 0.0
    %984 = vmatpush.msra.mxu0 0.0
    %985 = vmatpush.msra.mxu0 0.0
    %986 = vmatpush.msra.mxu0 0.0
    %987 = vmatpush.msra.mxu0 0.0
    %988 = vmatpush.msra.mxu0 0.0
    %989 = vmatpush.msra.mxu0 0.0
    %990 = vmatpush.msra.mxu0 %v778
    %991 = vmatpush.msra.mxu0 %v777
    %992 = vmatpush.msra.mxu0 %v776
    %993 = vmatpush.msra.mxu0 %v775
    %994 = vmatmul.f32.gmra.mxu0 %v976
    %v995 = vpop.f32.mrf.mxu0
    %v996 = vadd.f32 0.0, %v995
    %997 = vdwg.mxu0
    %v998 = vadd.f32 %v975, %v996
    %v999 = vxor.u32 %v998, 2147483648
    %v1000 = vmul.f32 %v999, 1.442695
    %v1001 = vpow.pop %v1000
    %v1002 = vadd.f32 %v1001, 1.0
    %v1003 = vrcp.pop %v1002
    %v1004 = vmul.f32 %v1002, %v1003
    %v1005 = vsub.f32 1.0, %v1004
    %v1006 = vmul.f32 %v1003, %v1005
    %v1007 = vadd.f32 %v1003, %v1006
    %vm1008 = vweird.f32 %v1002
    %vm1009 = vweird.f32 %v1003
    %vm1010 = vmor %vm1008, %vm1009
    %v1011 = vsel %vm1010, %v1003, %v1007
    %v1012 = vand.u32 2147483647, %v1002
    %vm1013 = vcmp.eq.f32.partialorder %v1012, 8.507059e+37
    %v1014 = vand.u32 %v1002, 2147483648
    %v1015 = vor.u32 1.1754944e-38, %v1014
    %v1016 = vsel %vm1013, %v1015, %v1011
    %v1017 = vmul.f32 1.0, %v1016
    %v1018 = vtanh.pop %v998
    %v1019 = vmul.f32 %v1017, %v963
    %1021 = vrot.lane.b32.xlu0 %v1018, 64
    %v1022 = vpop.permute.xlu0 %1021
    %v1024 = vmul.f32 %v1017, %v1022
    %1026 = vrot.lane.b32.xlu0 %v1024, 32
    %v1027 = vpop.permute.xlu0 %1026
    %v1029 = vadd.f32 %v1019, %v1027
    %v1030 = vtanh.pop %v1029
    %1032 = vrot.lane.b32.xlu0 %v1030, 64
    %v1033 = vpop.permute.xlu0 %1032
    %v1035 = vmul.f32 %v1017, %v1033
    %1037 = vrot.lane.b32.xlu0 %v1035, 32
    %v1038 = vpop.permute.xlu0 %1037
    %1040 = vst.msk [vmem:[#allocation3 + $0xc] sm:$0xf] %vm254, %v1038
    %v1041 = vld [vmem:[#allocation2 + $0x10] sm:$0xf]
    %v1042 = vsel %vm188, %v1038, 0
    %1044 = vmatpush.msra.mxu0 0.0
    %1045 = vmatpush.msra.mxu0 0.0
    %1046 = vmatpush.msra.mxu0 0.0
    %1047 = vmatpush.msra.mxu0 0.0
    %1048 = vmatpush.msra.mxu0 0.0
    %1049 = vmatpush.msra.mxu0 0.0
    %1050 = vmatpush.msra.mxu0 0.0
    %1051 = vmatpush.msra.mxu0 0.0
    %1052 = vmatpush.msra.mxu0 0.0
    %1053 = vmatpush.msra.mxu0 0.0
    %1054 = vmatpush.msra.mxu0 0.0
    %1055 = vmatpush.msra.mxu0 0.0
    %1056 = vmatpush.msra.mxu0 %v778
    %1057 = vmatpush.msra.mxu0 %v777
    %1058 = vmatpush.msra.mxu0 %v776
    %1059 = vmatpush.msra.mxu0 %v775
    %1060 = vmatmul.f32.gmra.mxu0 %v1042
    %v1061 = vpop.f32.mrf.mxu0
    %v1062 = vadd.f32 0.0, %v1061
    %1063 = vdwg.mxu0
    %v1064 = vadd.f32 %v1041, %v1062
    %v1065 = vxor.u32 %v1064, 2147483648
    %v1066 = vmul.f32 %v1065, 1.442695
    %v1067 = vpow.pop %v1066
    %v1068 = vadd.f32 %v1067, 1.0
    %v1069 = vrcp.pop %v1068
    %v1070 = vmul.f32 %v1068, %v1069
    %v1071 = vsub.f32 1.0, %v1070
    %v1072 = vmul.f32 %v1069, %v1071
    %v1073 = vadd.f32 %v1069, %v1072
    %vm1074 = vweird.f32 %v1068
    %vm1075 = vweird.f32 %v1069
    %vm1076 = vmor %vm1074, %vm1075
    %v1077 = vsel %vm1076, %v1069, %v1073
    %v1078 = vand.u32 2147483647, %v1068
    %vm1079 = vcmp.eq.f32.partialorder %v1078, 8.507059e+37
    %v1080 = vand.u32 %v1068, 2147483648
    %v1081 = vor.u32 1.1754944e-38, %v1080
    %v1082 = vsel %vm1079, %v1081, %v1077
    %v1083 = vmul.f32 1.0, %v1082
    %v1084 = vtanh.pop %v1064
    %v1085 = vmul.f32 %v1083, %v1029
    %1087 = vrot.lane.b32.xlu0 %v1084, 64
    %v1088 = vpop.permute.xlu0 %1087
    %v1090 = vmul.f32 %v1083, %v1088
    %1092 = vrot.lane.b32.xlu0 %v1090, 32
    %v1093 = vpop.permute.xlu0 %1092
    %v1095 = vadd.f32 %v1085, %v1093
    %v1096 = vtanh.pop %v1095
    %1098 = vrot.lane.b32.xlu0 %v1096, 64
    %v1099 = vpop.permute.xlu0 %1098
    %v1101 = vmul.f32 %v1083, %v1099
    %1103 = vrot.lane.b32.xlu0 %v1101, 32
    %v1104 = vpop.permute.xlu0 %1103
    %1106 = vst.msk [vmem:[#allocation3 + $0x10] sm:$0xf] %vm254, %v1104
    %v1107 = vld [vmem:[#allocation2 + $0x14] sm:$0xf]
    %v1108 = vsel %vm188, %v1104, 0
    %1110 = vmatpush.msra.mxu0 0.0
    %1111 = vmatpush.msra.mxu0 0.0
    %1112 = vmatpush.msra.mxu0 0.0
    %1113 = vmatpush.msra.mxu0 0.0
    %1114 = vmatpush.msra.mxu0 0.0
    %1115 = vmatpush.msra.mxu0 0.0
    %1116 = vmatpush.msra.mxu0 0.0
    %1117 = vmatpush.msra.mxu0 0.0
    %1118 = vmatpush.msra.mxu0 0.0
    %1119 = vmatpush.msra.mxu0 0.0
    %1120 = vmatpush.msra.mxu0 0.0
    %1121 = vmatpush.msra.mxu0 0.0
    %1122 = vmatpush.msra.mxu0 %v778
    %1123 = vmatpush.msra.mxu0 %v777
    %1124 = vmatpush.msra.mxu0 %v776
    %1125 = vmatpush.msra.mxu0 %v775
    %1126 = vmatmul.f32.gmra.mxu0 %v1108
    %v1127 = vpop.f32.mrf.mxu0
    %v1128 = vadd.f32 0.0, %v1127
    %1129 = vdwg.mxu0
    %v1130 = vadd.f32 %v1107, %v1128
    %v1131 = vxor.u32 %v1130, 2147483648
    %v1132 = vmul.f32 %v1131, 1.442695
    %v1133 = vpow.pop %v1132
    %v1134 = vadd.f32 %v1133, 1.0
    %v1135 = vrcp.pop %v1134
    %v1136 = vmul.f32 %v1134, %v1135
    %v1137 = vsub.f32 1.0, %v1136
    %v1138 = vmul.f32 %v1135, %v1137
    %v1139 = vadd.f32 %v1135, %v1138
    %vm1140 = vweird.f32 %v1134
    %vm1141 = vweird.f32 %v1135
    %vm1142 = vmor %vm1140, %vm1141
    %v1143 = vsel %vm1142, %v1135, %v1139
    %v1144 = vand.u32 2147483647, %v1134
    %vm1145 = vcmp.eq.f32.partialorder %v1144, 8.507059e+37
    %v1146 = vand.u32 %v1134, 2147483648
    %v1147 = vor.u32 1.1754944e-38, %v1146
    %v1148 = vsel %vm1145, %v1147, %v1143
    %v1149 = vmul.f32 1.0, %v1148
    %v1150 = vtanh.pop %v1130
    %v1151 = vmul.f32 %v1149, %v1095
    %1153 = vrot.lane.b32.xlu0 %v1150, 64
    %v1154 = vpop.permute.xlu0 %1153
    %v1156 = vmul.f32 %v1149, %v1154
    %1158 = vrot.lane.b32.xlu0 %v1156, 32
    %v1159 = vpop.permute.xlu0 %1158
    %v1161 = vadd.f32 %v1151, %v1159
    %v1162 = vtanh.pop %v1161
    %1164 = vrot.lane.b32.xlu0 %v1162, 64
    %v1165 = vpop.permute.xlu0 %1164
    %v1167 = vmul.f32 %v1149, %v1165
    %1169 = vrot.lane.b32.xlu0 %v1167, 32
    %v1170 = vpop.permute.xlu0 %1169
    %1172 = vst.msk [vmem:[#allocation3 + $0x14] sm:$0xf] %vm254, %v1170
    %v1173 = vld [vmem:[#allocation2 + $0x18] sm:$0xf]
    %v1174 = vsel %vm188, %v1170, 0
    %1176 = vmatpush.msra.mxu0 0.0
    %1177 = vmatpush.msra.mxu0 0.0
    %1178 = vmatpush.msra.mxu0 0.0
    %1179 = vmatpush.msra.mxu0 0.0
    %1180 = vmatpush.msra.mxu0 0.0
    %1181 = vmatpush.msra.mxu0 0.0
    %1182 = vmatpush.msra.mxu0 0.0
    %1183 = vmatpush.msra.mxu0 0.0
    %1184 = vmatpush.msra.mxu0 0.0
    %1185 = vmatpush.msra.mxu0 0.0
    %1186 = vmatpush.msra.mxu0 0.0
    %1187 = vmatpush.msra.mxu0 0.0
    %1188 = vmatpush.msra.mxu0 %v778
    %1189 = vmatpush.msra.mxu0 %v777
    %1190 = vmatpush.msra.mxu0 %v776
    %1191 = vmatpush.msra.mxu0 %v775
    %1192 = vmatmul.f32.gmra.mxu0 %v1174
    %v1193 = vpop.f32.mrf.mxu0
    %v1194 = vadd.f32 0.0, %v1193
    %1195 = vdwg.mxu0
    %v1196 = vadd.f32 %v1173, %v1194
    %v1197 = vxor.u32 %v1196, 2147483648
    %v1198 = vmul.f32 %v1197, 1.442695
    %v1199 = vpow.pop %v1198
    %v1200 = vadd.f32 %v1199, 1.0
    %v1201 = vrcp.pop %v1200
    %v1202 = vmul.f32 %v1200, %v1201
    %v1203 = vsub.f32 1.0, %v1202
    %v1204 = vmul.f32 %v1201, %v1203
    %v1205 = vadd.f32 %v1201, %v1204
    %vm1206 = vweird.f32 %v1200
    %vm1207 = vweird.f32 %v1201
    %vm1208 = vmor %vm1206, %vm1207
    %v1209 = vsel %vm1208, %v1201, %v1205
    %v1210 = vand.u32 2147483647, %v1200
    %vm1211 = vcmp.eq.f32.partialorder %v1210, 8.507059e+37
    %v1212 = vand.u32 %v1200, 2147483648
    %v1213 = vor.u32 1.1754944e-38, %v1212
    %v1214 = vsel %vm1211, %v1213, %v1209
    %v1215 = vmul.f32 1.0, %v1214
    %v1216 = vtanh.pop %v1196
    %v1217 = vmul.f32 %v1215, %v1161
    %1219 = vrot.lane.b32.xlu0 %v1216, 64
    %v1220 = vpop.permute.xlu0 %1219
    %v1222 = vmul.f32 %v1215, %v1220
    %1224 = vrot.lane.b32.xlu0 %v1222, 32
    %v1225 = vpop.permute.xlu0 %1224
    %v1227 = vadd.f32 %v1217, %v1225
    %v1228 = vtanh.pop %v1227
    %1230 = vrot.lane.b32.xlu0 %v1228, 64
    %v1231 = vpop.permute.xlu0 %1230
    %v1233 = vmul.f32 %v1215, %v1231
    %1235 = vrot.lane.b32.xlu0 %v1233, 32
    %v1236 = vpop.permute.xlu0 %1235
    %1238 = vst.msk [vmem:[#allocation3 + $0x18] sm:$0xf] %vm254, %v1236
    %v1239 = vld [vmem:[#allocation2 + $0x1c] sm:$0xf]
    %v1240 = vsel %vm188, %v1236, 0
    %1242 = vmatpush.msra.mxu0 0.0
    %1243 = vmatpush.msra.mxu0 0.0
    %1244 = vmatpush.msra.mxu0 0.0
    %1245 = vmatpush.msra.mxu0 0.0
    %1246 = vmatpush.msra.mxu0 0.0
    %1247 = vmatpush.msra.mxu0 0.0
    %1248 = vmatpush.msra.mxu0 0.0
    %1249 = vmatpush.msra.mxu0 0.0
    %1250 = vmatpush.msra.mxu0 0.0
    %1251 = vmatpush.msra.mxu0 0.0
    %1252 = vmatpush.msra.mxu0 0.0
    %1253 = vmatpush.msra.mxu0 0.0
    %1254 = vmatpush.msra.mxu0 %v778
    %1255 = vmatpush.msra.mxu0 %v777
    %1256 = vmatpush.msra.mxu0 %v776
    %1257 = vmatpush.msra.mxu0 %v775
    %1258 = vmatmul.f32.gmra.mxu0 %v1240
    %v1259 = vpop.f32.mrf.mxu0
    %v1260 = vadd.f32 0.0, %v1259
    %1261 = vdwg.mxu0
    %v1262 = vadd.f32 %v1239, %v1260
    %v1263 = vxor.u32 %v1262, 2147483648
    %v1264 = vmul.f32 %v1263, 1.442695
    %v1265 = vpow.pop %v1264
    %v1266 = vadd.f32 %v1265, 1.0
    %v1267 = vrcp.pop %v1266
    %v1268 = vmul.f32 %v1266, %v1267
    %v1269 = vsub.f32 1.0, %v1268
    %v1270 = vmul.f32 %v1267, %v1269
    %v1271 = vadd.f32 %v1267, %v1270
    %vm1272 = vweird.f32 %v1266
    %vm1273 = vweird.f32 %v1267
    %vm1274 = vmor %vm1272, %vm1273
    %v1275 = vsel %vm1274, %v1267, %v1271
    %v1276 = vand.u32 2147483647, %v1266
    %vm1277 = vcmp.eq.f32.partialorder %v1276, 8.507059e+37
    %v1278 = vand.u32 %v1266, 2147483648
    %v1279 = vor.u32 1.1754944e-38, %v1278
    %v1280 = vsel %vm1277, %v1279, %v1275
    %v1281 = vmul.f32 1.0, %v1280
    %v1282 = vtanh.pop %v1262
    %v1283 = vmul.f32 %v1281, %v1227
    %1285 = vrot.lane.b32.xlu0 %v1282, 64
    %v1286 = vpop.permute.xlu0 %1285
    %v1288 = vmul.f32 %v1281, %v1286
    %1290 = vrot.lane.b32.xlu0 %v1288, 32
    %v1291 = vpop.permute.xlu0 %1290
    %v1293 = vadd.f32 %v1283, %v1291
    %v1294 = vtanh.pop %v1293
    %1296 = vrot.lane.b32.xlu0 %v1294, 64
    %v1297 = vpop.permute.xlu0 %1296
    %v1299 = vmul.f32 %v1281, %v1297
    %1301 = vrot.lane.b32.xlu0 %v1299, 32
    %v1302 = vpop.permute.xlu0 %1301
    %1304 = vst.msk [vmem:[#allocation3 + $0x1c] sm:$0xf] %vm254, %v1302
    %v1305 = vld [vmem:[#allocation3] sm:$0xff]
    %v1306 = vld [vmem:[#allocation3 + $0x8] sm:$0xff]
    %v1307 = vld [vmem:[#allocation3 + $0x10] sm:$0xff]
    %v1308 = vld [vmem:[#allocation3 + $0x18] sm:$0xff]
    %v1309 = vld [vmem:[#allocation13] sm:$0xff]
    %v1310 = vld [vmem:[#allocation13 + $0x8] sm:$0xff]
    %v1311 = vld [vmem:[#allocation13 + $0x10] sm:$0xff]
    %v1312 = vld [vmem:[#allocation13 + $0x18] sm:$0xff]
    %v1313 = vld [vmem:[%s8] sm:$0x1]
    %v1315 = vperm.slane %v1313, 0
    %v1318 = vsel %vm188, %v1305, 0
    %v1321 = vsel %vm188, %v1306, 0
    %v1324 = vsel %vm188, %v1307, 0
    %v1327 = vsel %vm188, %v1308, 0
    %1329 = vmatpush.msra.mxu0 0.0
    %1330 = vmatpush.msra.mxu0 0.0
    %1331 = vmatpush.msra.mxu0 0.0
    %1332 = vmatpush.msra.mxu0 0.0
    %1333 = vmatpush.msra.mxu0 0.0
    %1334 = vmatpush.msra.mxu0 0.0
    %1335 = vmatpush.msra.mxu0 0.0
    %1336 = vmatpush.msra.mxu0 0.0
    %1337 = vmatpush.msra.mxu0 0.0
    %1338 = vmatpush.msra.mxu0 0.0
    %1339 = vmatpush.msra.mxu0 0.0
    %1340 = vmatpush.msra.mxu0 0.0
    %1341 = vmatpush.msra.mxu0 %v1312
    %1342 = vmatpush.msra.mxu0 %v1311
    %1343 = vmatpush.msra.mxu0 %v1310
    %1344 = vmatpush.msra.mxu0 %v1309
    %1345 = vmatmul.f32.gmra.mxu0 %v1318
    %v1346 = vpop.f32.mrf.mxu0
    %v1347 = vadd.f32 %v1315, %v1346
    %1348 = vmatmul.f32.gmra.mxu0 %v1321
    %v1349 = vpop.f32.mrf.mxu0
    %v1350 = vadd.f32 %v1315, %v1349
    %1351 = vmatmul.f32.gmra.mxu0 %v1324
    %v1352 = vpop.f32.mrf.mxu0
    %v1353 = vadd.f32 %v1315, %v1352
    %1354 = vmatmul.f32.gmra.mxu0 %v1327
    %v1355 = vpop.f32.mrf.mxu0
    %v1356 = vadd.f32 %v1315, %v1355
    %1357 = vdwg.mxu0
    %vm1358 = vcmask 408576
    %1359 = vst.msk [vmem:[#allocation15] sm:$0xff] %vm1358, %v1347
    %1360 = vst.msk [vmem:[#allocation15 + $0x8] sm:$0xff] %vm1358, %v1350
    %1361 = vst.msk [vmem:[#allocation15 + $0x10] sm:$0xff] %vm1358, %v1353
    %1362 = vst.msk [vmem:[#allocation15 + $0x18] sm:$0xff] %vm1358, %v1356
    // Predicated region
    $region62: #{fused_forward.1} parent=1 // pred_check
      _
    $region63: #{fused_forward.1} parent=1 // pred_check_branch
      %1364 = sbr.rel (0) target = $region65
    $region64: #{fused_forward.1} parent=1 // pred_region
      %1366 = vsyncadd [#allocation6], 0
      %s1367 = sshll.u32 [#allocation15], 4
      %s1368 = int_to_ptr.vmem [resolvable:$true] %s1367
      %s1369 = sshll.u32 %s9, 4
      %s1370 = int_to_ptr.hbm [resolvable:$true] %s1369
      %1375 = dma.vmem_to_hbm [thread:$0]  %s1368, 512, %s1370, [#allocation6], 128, 128, 8
    $region65: #{fused_forward.1} parent=1 // pred_fallthru
      _
    // Predicated region
    $region66: #{fused_forward.1} parent=1 // pred_check
      _
    $region67: #{fused_forward.1} parent=1 // pred_check_branch
      %1377 = sbr.rel (0) target = $region69
    $region68: #{fused_forward.1} parent=1 // pred_region
      %1379 = dma.done [#allocation6], 512
    $region69: #{fused_forward.1} parent=1 // pred_fallthru
      _
    %1380 = vsyncpa [#allocation5], 1
    %1381 = vsyncpa [#allocation8], 1
    %1382 = vsyncpa [#allocation11], 1
    %1383 = vsyncpa [#allocation14], 1
    %1384 = vsyncpa [#allocation6], 1

</llo_original>
